<compile_context>
chip_gen: v5e
topology: v5e:2x2
jax: 0.10.0
libtpu: 0.0.40
codegen_flags: <defaults>
</compile_context>

<pallas_src>
import functools

import jax
import jax.numpy as jnp
from jax.experimental import pallas as pl
from jax.experimental.pallas import tpu as pltpu


def _round_up(n, m):
    return ((n + m - 1) // m) * m


def _make_decoder_kernel(act_dtype):
    """act_dtype: dtype for the tanh activations (f32 on v5e, bf16 on v6e/v7x)."""

    def decoder_kernel(z_ref, p_ref,
                       w1z_ref, w1p_ref, b1_ref,
                       w2_ref, b2_ref,
                       w3_ref, b3_ref,
                       w4_ref, b4_ref,
                       out_ref):
        # fc1 with the concat fused away: h = z @ W1z + P @ W1p + b1.
        zb = z_ref[...].astype(jnp.bfloat16)
        pb = p_ref[...].astype(jnp.bfloat16)
        h = (jnp.dot(zb, w1z_ref[...], preferred_element_type=jnp.float32)
             + jnp.dot(pb, w1p_ref[...], preferred_element_type=jnp.float32)
             + b1_ref[...])
        h = jnp.tanh(h.astype(act_dtype)).astype(jnp.bfloat16)

        # fc2 + tanh
        h = jnp.dot(h, w2_ref[...], preferred_element_type=jnp.float32) + b2_ref[...]
        h = jnp.tanh(h.astype(act_dtype)).astype(jnp.bfloat16)

        # fc3 + tanh
        h = jnp.dot(h, w3_ref[...], preferred_element_type=jnp.float32) + b3_ref[...]
        h = jnp.tanh(h.astype(act_dtype)).astype(jnp.bfloat16)

        # fc4 (no activation) — narrow, un-padded output block.
        out = jnp.dot(h, w4_ref[...], preferred_element_type=jnp.float32) + b4_ref[...]
        out_ref[...] = out.astype(out_ref.dtype)

    return decoder_kernel


def prepare_params(params, latent_dim):
    """One-time weight preprocessing (hoisted out of the forward pass).

    Splits fc1's weight so concat([z, P]) becomes two in-kernel matmuls, and
    casts matmul operands to bf16 (MXU-native); biases stay f32.
    """
    (w1, b1), (w2, b2), (w3, b3), (w4, b4) = params
    w1z = w1[:latent_dim, :].astype(jnp.bfloat16)
    w1p = w1[latent_dim:, :].astype(jnp.bfloat16)
    return (w1z, w1p, b1.astype(jnp.float32),
            w2.astype(jnp.bfloat16), b2.astype(jnp.float32),
            w3.astype(jnp.bfloat16), b3.astype(jnp.float32),
            w4.astype(jnp.bfloat16), b4.astype(jnp.float32))


@functools.partial(jax.jit, static_argnames=("block_batch", "use_bf16_act"))
def decoder_forward(z, P, prepped, *, block_batch=512, use_bf16_act=False):
    """z: [B, latent_dim], P: [B, P_dim] -> S_hat: [B, S_dim] (float32)."""
    w1z, w1p, b1, w2, b2, w3, b3, w4, b4 = prepped
    B, latent_dim = z.shape
    P_dim = P.shape[1]
    S_dim = w4.shape[1]

    # Batch tile: multiple of 8 sublanes; cap at ~B/2 so the grid keeps >=2
    # balanced steps when B allows (lets the "parallel" axis use both v7x TCs).
    TB = min(block_batch, max(_round_up(pl.cdiv(B, 2), 8), 8))
    B_pad = _round_up(B, TB)
    if B_pad != B:
        z = jnp.pad(z, ((0, B_pad - B), (0, 0)))
        P = jnp.pad(P, ((0, B_pad - B), (0, 0)))
    grid = (B_pad // TB,)

    def batch_spec(n_feat):
        return pl.BlockSpec((TB, n_feat), lambda i: (i, 0))

    def resident_spec(arr):
        # Constant index_map -> same block every grid step -> weights/biases
        # stay resident in VMEM with no re-DMA.
        return pl.BlockSpec(arr.shape, lambda i: (0, 0))

    act_dtype = jnp.bfloat16 if use_bf16_act else jnp.float32
    kernel = _make_decoder_kernel(act_dtype)

    out = pl.pallas_call(
        kernel,
        out_shape=jax.ShapeDtypeStruct((B_pad, S_dim), jnp.float32),
        grid=grid,
        in_specs=[
            batch_spec(latent_dim),
            batch_spec(P_dim),
            resident_spec(w1z), resident_spec(w1p), resident_spec(b1),
            resident_spec(w2), resident_spec(b2),
            resident_spec(w3), resident_spec(b3),
            resident_spec(w4), resident_spec(b4),
        ],
        # Output block covers the full (un-padded) S_dim: ~10x fewer HBM write
        # bytes than padding to 128 lanes, and no wrapper de-pad slice.
        out_specs=pl.BlockSpec((TB, S_dim), lambda i: (i, 0)),
        compiler_params=pltpu.CompilerParams(
            dimension_semantics=("parallel",)),
    )(z, P, w1z, w1p, b1, w2, b2, w3, b3, w4, b4)

    return out if B_pad == B else out[:B]


def default_use_bf16_act():
    """bf16 tanh only on v6e/v7x (bf16-capable EUP); f32 on v5e and older."""
    try:
        kind = jax.devices()[0].device_kind.lower()
    except Exception:
        return False
    return ("v6" in kind) or ("v7" in kind)


def init_decoder_params(key, S_dim, P_dim, latent_dim):
    """Deterministic synthetic init (PyTorch-Linear-like uniform fan-in)."""
    input_dim = latent_dim + P_dim
    dims = [(input_dim, 128), (128, 64), (64, 32), (32, S_dim)]
    params = []
    for (d_in, d_out) in dims:
        key, kw, kb = jax.random.split(key, 3)
        bound = 1.0 / (d_in ** 0.5)
        W = jax.random.uniform(kw, (d_in, d_out), jnp.float32, -bound, bound)
        b = jax.random.uniform(kb, (1, d_out), jnp.float32, -bound, bound)
        params.append((W, b))
    return params


def reference_forward(z, P, params, *, act_dtype=jnp.float32):
    """Pure-JAX reference with matching bf16-operand / f32-accumulate math."""
    (w1, b1), (w2, b2), (w3, b3), (w4, b4) = params

    def lin(h, w, b):
        return jnp.dot(h.astype(jnp.bfloat16), w.astype(jnp.bfloat16),
                       preferred_element_type=jnp.float32) + b

    x = jnp.concatenate([z, P], axis=1)
    h = jnp.tanh(lin(x, w1, b1).astype(act_dtype))
    h = jnp.tanh(lin(h, w2, b2).astype(act_dtype))
    h = jnp.tanh(lin(h, w3, b3).astype(act_dtype))
    return lin(h, w4, b4)


if __name__ == "__main__":
    # Shapes consistent with the module's forward; batch chosen so the batch
    # grid has 2 pipelined steps (512 rows / 256-row tiles).
    batch = 512
    latent_dim = 16
    P_dim = 8
    S_dim = 12

    key = jax.random.PRNGKey(0)
    kz, kp, kparam = jax.random.split(key, 3)

    z = jax.random.normal(kz, (batch, latent_dim), dtype=jnp.float32)
    P = jax.random.normal(kp, (batch, P_dim), dtype=jnp.float32)
    params = init_decoder_params(kparam, S_dim, P_dim, latent_dim)
    prepped = prepare_params(params, latent_dim)

    use_bf16_act = default_use_bf16_act()
    try:
        S_hat = decoder_forward(z, P, prepped, block_batch=512,
                                use_bf16_act=use_bf16_act)
        jax.block_until_ready(S_hat)
    except Exception:
        # Conservative fallback: f32 activations (always supported).
        use_bf16_act = False
        S_hat = decoder_forward(z, P, prepped, block_batch=512,
                                use_bf16_act=use_bf16_act)
        jax.block_until_ready(S_hat)

    act_dtype = jnp.bfloat16 if use_bf16_act else jnp.float32
    ref = reference_forward(z, P, params, act_dtype=act_dtype)
    assert S_hat.shape == (batch, S_dim)
    tol = 3e-2 if use_bf16_act else 1e-4
    max_err = float(jnp.max(jnp.abs(S_hat - ref)))
    assert jnp.allclose(S_hat, ref, atol=tol, rtol=tol), max_err

    print("KERNEL_OK")
</pallas_src>

<mosaic_0001>
module attributes {stable_mosaic.version = 11 : i64} {
  func.func @decoder_kernel(%arg0: i32, %arg1: memref<256x16xf32, #tpu.memory_space<vmem>>, %arg2: memref<256x8xf32, #tpu.memory_space<vmem>>, %arg3: memref<16x128xbf16, #tpu.memory_space<vmem>>, %arg4: memref<8x128xbf16, #tpu.memory_space<vmem>>, %arg5: memref<1x128xf32, #tpu.memory_space<vmem>>, %arg6: memref<128x64xbf16, #tpu.memory_space<vmem>>, %arg7: memref<1x64xf32, #tpu.memory_space<vmem>>, %arg8: memref<64x32xbf16, #tpu.memory_space<vmem>>, %arg9: memref<1x32xf32, #tpu.memory_space<vmem>>, %arg10: memref<32x12xbf16, #tpu.memory_space<vmem>>, %arg11: memref<1x12xf32, #tpu.memory_space<vmem>>, %arg12: memref<256x12xf32, #tpu.memory_space<vmem>>) attributes {dimension_semantics = [#tpu.dimension_semantics<parallel>], iteration_bounds = array<i64: 2>, scalar_prefetch = 0 : i64, scratch_operands = 0 : i64, tpu.core_type = #tpu.core_type<tc>, window_params = [{transform_indices = @transform_0, window_bounds = array<i64: 256, 16>}, {transform_indices = @transform_1, window_bounds = array<i64: 256, 8>}, {pipeline_mode = #tpu.pipeline_mode<synchronous>, transform_indices = @transform_2, window_bounds = array<i64: 16, 128>}, {pipeline_mode = #tpu.pipeline_mode<synchronous>, transform_indices = @transform_3, window_bounds = array<i64: 8, 128>}, {pipeline_mode = #tpu.pipeline_mode<synchronous>, transform_indices = @transform_4, window_bounds = array<i64: 1, 128>}, {pipeline_mode = #tpu.pipeline_mode<synchronous>, transform_indices = @transform_5, window_bounds = array<i64: 128, 64>}, {pipeline_mode = #tpu.pipeline_mode<synchronous>, transform_indices = @transform_6, window_bounds = array<i64: 1, 64>}, {pipeline_mode = #tpu.pipeline_mode<synchronous>, transform_indices = @transform_7, window_bounds = array<i64: 64, 32>}, {pipeline_mode = #tpu.pipeline_mode<synchronous>, transform_indices = @transform_8, window_bounds = array<i64: 1, 32>}, {pipeline_mode = #tpu.pipeline_mode<synchronous>, transform_indices = @transform_9, window_bounds = array<i64: 32, 12>}, {pipeline_mode = #tpu.pipeline_mode<synchronous>, transform_indices = @transform_10, window_bounds = array<i64: 1, 12>}, {transform_indices = @transform_11, window_bounds = array<i64: 256, 12>}]} {
    %c0 = arith.constant 0 : index
    %c0_0 = arith.constant 0 : index
    %0 = vector.load %arg1[%c0, %c0_0] : memref<256x16xf32, #tpu.memory_space<vmem>>, vector<256x16xf32>
    %1 = arith.truncf %0 : vector<256x16xf32> to vector<256x16xbf16>
    %c0_1 = arith.constant 0 : index
    %c0_2 = arith.constant 0 : index
    %2 = vector.load %arg2[%c0_1, %c0_2] : memref<256x8xf32, #tpu.memory_space<vmem>>, vector<256x8xf32>
    %3 = arith.truncf %2 : vector<256x8xf32> to vector<256x8xbf16>
    %c0_3 = arith.constant 0 : index
    %c0_4 = arith.constant 0 : index
    %4 = vector.load %arg3[%c0_3, %c0_4] : memref<16x128xbf16, #tpu.memory_space<vmem>>, vector<16x128xbf16>
    %cst = arith.constant dense<0.000000e+00> : vector<256x128xf32>
    %5 = tpu.matmul %1, %4, %cst {dimension_numbers = #tpu.dot_dimension_numbers<[1], [0], [0], [1], [0, 0, 1, 1], [], []>} : vector<256x16xbf16>, vector<16x128xbf16>, vector<256x128xf32> -> vector<256x128xf32>
    %c0_5 = arith.constant 0 : index
    %c0_6 = arith.constant 0 : index
    %6 = vector.load %arg4[%c0_5, %c0_6] : memref<8x128xbf16, #tpu.memory_space<vmem>>, vector<8x128xbf16>
    %cst_7 = arith.constant dense<0.000000e+00> : vector<256x128xf32>
    %7 = tpu.matmul %3, %6, %cst_7 {dimension_numbers = #tpu.dot_dimension_numbers<[1], [0], [0], [1], [0, 0, 1, 1], [], []>} : vector<256x8xbf16>, vector<8x128xbf16>, vector<256x128xf32> -> vector<256x128xf32>
    %8 = arith.addf %5, %7 : vector<256x128xf32>
    %c0_8 = arith.constant 0 : index
    %c0_9 = arith.constant 0 : index
    %9 = vector.load %arg5[%c0_8, %c0_9] : memref<1x128xf32, #tpu.memory_space<vmem>>, vector<1x128xf32>
    %10 = vector.broadcast %9 : vector<1x128xf32> to vector<256x128xf32>
    %11 = arith.addf %8, %10 : vector<256x128xf32>
    %12 = math.tanh %11 : vector<256x128xf32>
    %13 = arith.truncf %12 : vector<256x128xf32> to vector<256x128xbf16>
    %c0_10 = arith.constant 0 : index
    %c0_11 = arith.constant 0 : index
    %14 = vector.load %arg6[%c0_10, %c0_11] : memref<128x64xbf16, #tpu.memory_space<vmem>>, vector<128x64xbf16>
    %cst_12 = arith.constant dense<0.000000e+00> : vector<256x64xf32>
    %15 = tpu.matmul %13, %14, %cst_12 {dimension_numbers = #tpu.dot_dimension_numbers<[1], [0], [0], [1], [0, 0, 1, 1], [], []>} : vector<256x128xbf16>, vector<128x64xbf16>, vector<256x64xf32> -> vector<256x64xf32>
    %c0_13 = arith.constant 0 : index
    %c0_14 = arith.constant 0 : index
    %16 = vector.load %arg7[%c0_13, %c0_14] : memref<1x64xf32, #tpu.memory_space<vmem>>, vector<1x64xf32>
    %17 = vector.broadcast %16 : vector<1x64xf32> to vector<256x64xf32>
    %18 = arith.addf %15, %17 : vector<256x64xf32>
    %19 = math.tanh %18 : vector<256x64xf32>
    %20 = arith.truncf %19 : vector<256x64xf32> to vector<256x64xbf16>
    %c0_15 = arith.constant 0 : index
    %c0_16 = arith.constant 0 : index
    %21 = vector.load %arg8[%c0_15, %c0_16] : memref<64x32xbf16, #tpu.memory_space<vmem>>, vector<64x32xbf16>
    %cst_17 = arith.constant dense<0.000000e+00> : vector<256x32xf32>
    %22 = tpu.matmul %20, %21, %cst_17 {dimension_numbers = #tpu.dot_dimension_numbers<[1], [0], [0], [1], [0, 0, 1, 1], [], []>} : vector<256x64xbf16>, vector<64x32xbf16>, vector<256x32xf32> -> vector<256x32xf32>
    %c0_18 = arith.constant 0 : index
    %c0_19 = arith.constant 0 : index
    %23 = vector.load %arg9[%c0_18, %c0_19] : memref<1x32xf32, #tpu.memory_space<vmem>>, vector<1x32xf32>
    %24 = vector.broadcast %23 : vector<1x32xf32> to vector<256x32xf32>
    %25 = arith.addf %22, %24 : vector<256x32xf32>
    %26 = math.tanh %25 : vector<256x32xf32>
    %27 = arith.truncf %26 : vector<256x32xf32> to vector<256x32xbf16>
    %c0_20 = arith.constant 0 : index
    %c0_21 = arith.constant 0 : index
    %28 = vector.load %arg10[%c0_20, %c0_21] : memref<32x12xbf16, #tpu.memory_space<vmem>>, vector<32x12xbf16>
    %cst_22 = arith.constant dense<0.000000e+00> : vector<256x12xf32>
    %29 = tpu.matmul %27, %28, %cst_22 {dimension_numbers = #tpu.dot_dimension_numbers<[1], [0], [0], [1], [0, 0, 1, 1], [], []>} : vector<256x32xbf16>, vector<32x12xbf16>, vector<256x12xf32> -> vector<256x12xf32>
    %c0_23 = arith.constant 0 : index
    %c0_24 = arith.constant 0 : index
    %30 = vector.load %arg11[%c0_23, %c0_24] : memref<1x12xf32, #tpu.memory_space<vmem>>, vector<1x12xf32>
    %31 = vector.broadcast %30 : vector<1x12xf32> to vector<256x12xf32>
    %32 = arith.addf %29, %31 : vector<256x12xf32>
    %c0_25 = arith.constant 0 : index
    %c0_26 = arith.constant 0 : index
    %33 = vector.load %arg12[%c0_25, %c0_26] : memref<256x12xf32, #tpu.memory_space<vmem>>, vector<256x12xf32>
    tpu.vector_store %arg12[%c0_25, %c0_26], %32 {strides = array<i32>} : memref<256x12xf32, #tpu.memory_space<vmem>>, vector<256x12xf32>,
    return
  }
  func.func @transform_0(%arg0: i32) -> (i32, i32) {
    %c0_i32 = arith.constant 0 : i32
    %c0_i32_0 = arith.constant 0 : i32
    return %arg0, %c0_i32 : i32, i32
  }
  func.func @transform_1(%arg0: i32) -> (i32, i32) {
    %c0_i32 = arith.constant 0 : i32
    %c0_i32_0 = arith.constant 0 : i32
    return %arg0, %c0_i32 : i32, i32
  }
  func.func @transform_2(%arg0: i32) -> (i32, i32) {
    %c0_i32 = arith.constant 0 : i32
    %c0_i32_0 = arith.constant 0 : i32
    %c0_i32_1 = arith.constant 0 : i32
    return %c0_i32, %c0_i32_0 : i32, i32
  }
  func.func @transform_3(%arg0: i32) -> (i32, i32) {
    %c0_i32 = arith.constant 0 : i32
    %c0_i32_0 = arith.constant 0 : i32
    %c0_i32_1 = arith.constant 0 : i32
    return %c0_i32, %c0_i32_0 : i32, i32
  }
  func.func @transform_4(%arg0: i32) -> (i32, i32) {
    %c0_i32 = arith.constant 0 : i32
    %c0_i32_0 = arith.constant 0 : i32
    %c0_i32_1 = arith.constant 0 : i32
    return %c0_i32, %c0_i32_0 : i32, i32
  }
  func.func @transform_5(%arg0: i32) -> (i32, i32) {
    %c0_i32 = arith.constant 0 : i32
    %c0_i32_0 = arith.constant 0 : i32
    %c0_i32_1 = arith.constant 0 : i32
    return %c0_i32, %c0_i32_0 : i32, i32
  }
  func.func @transform_6(%arg0: i32) -> (i32, i32) {
    %c0_i32 = arith.constant 0 : i32
    %c0_i32_0 = arith.constant 0 : i32
    %c0_i32_1 = arith.constant 0 : i32
    return %c0_i32, %c0_i32_0 : i32, i32
  }
  func.func @transform_7(%arg0: i32) -> (i32, i32) {
    %c0_i32 = arith.constant 0 : i32
    %c0_i32_0 = arith.constant 0 : i32
    %c0_i32_1 = arith.constant 0 : i32
    return %c0_i32, %c0_i32_0 : i32, i32
  }
  func.func @transform_8(%arg0: i32) -> (i32, i32) {
    %c0_i32 = arith.constant 0 : i32
    %c0_i32_0 = arith.constant 0 : i32
    %c0_i32_1 = arith.constant 0 : i32
    return %c0_i32, %c0_i32_0 : i32, i32
  }
  func.func @transform_9(%arg0: i32) -> (i32, i32) {
    %c0_i32 = arith.constant 0 : i32
    %c0_i32_0 = arith.constant 0 : i32
    %c0_i32_1 = arith.constant 0 : i32
    return %c0_i32, %c0_i32_0 : i32, i32
  }
  func.func @transform_10(%arg0: i32) -> (i32, i32) {
    %c0_i32 = arith.constant 0 : i32
    %c0_i32_0 = arith.constant 0 : i32
    %c0_i32_1 = arith.constant 0 : i32
    return %c0_i32, %c0_i32_0 : i32, i32
  }
  func.func @transform_11(%arg0: i32) -> (i32, i32) {
    %c0_i32 = arith.constant 0 : i32
    %c0_i32_0 = arith.constant 0 : i32
    return %arg0, %c0_i32 : i32, i32
  }
}

</mosaic_0001>

<llo_original>
// kernel: decoder_forward.1
$region0: #{decoder_forward.1}
  #allocation0 [shape = 'u32[]', space=smem, size = 0x4, offset = 0x4, fixed_abs, tag = 'smem constant byte address 0x4 - core index']
  #allocation1 [shape = 'u32[72,128]{1,0:T(1,128)}', space=vmem, size = 0x9000, scoped, tag = 'internal scratch']
  %s0 = inlined_call_operand.vmem [shape: f32[512,16], index: 0, kind: input, shape index: {}]
  %s1 = inlined_call_operand.vmem [shape: f32[512,8], index: 1, kind: input, shape index: {}]
  %s2 = inlined_call_operand.vmem [shape: bf16[16,128], index: 2, kind: input, shape index: {}]
  %s3 = inlined_call_operand.vmem [shape: bf16[8,128], index: 3, kind: input, shape index: {}]
  %s4 = inlined_call_operand.vmem [shape: f32[1,128], index: 4, kind: input, shape index: {}]
  %s5 = inlined_call_operand.vmem [shape: bf16[128,64], index: 5, kind: input, shape index: {}]
  %s6 = inlined_call_operand.vmem [shape: f32[1,64], index: 6, kind: input, shape index: {}]
  %s7 = inlined_call_operand.vmem [shape: bf16[64,32], index: 7, kind: input, shape index: {}]
  %s8 = inlined_call_operand.vmem [shape: f32[1,32], index: 8, kind: input, shape index: {}]
  %s9 = inlined_call_operand.vmem [shape: bf16[32,12], index: 9, kind: input, shape index: {}]
  %s10 = inlined_call_operand.vmem [shape: f32[1,12], index: 10, kind: input, shape index: {}]
  %s11 = inlined_call_operand.vmem [shape: f32[512,12], index: 11, kind: output, shape index: {}]
  %s12 = sld [smem:[#allocation0]]
  $region77: #{decoder_forward.1} parent=0
    _
  %s14 = ssub.s32 1, %s12
  %s15 = scalar_select 0, %s14, %s12
  loop: start=0, step=1, limit=4
  $region2: #{decoder_forward.1} parent=0 // loop_pre_header
    _
  $region3: #{decoder_forward.1} parent=0 // loop_header
    %s17 = sphi 0, %s21
    %p18 = scmp.ge.s32.totalorder %s17, 4
    %s27 = sphi 0, %s29
    %s30 = sphi 0, %s27
    %s31 = sphi 0, %s30
    %s47 = sphi 0, %s31
    %s53 = sphi 0, %s55
    %s56 = sphi 0, %s53
    %s57 = sphi 0, %s56
    %s73 = sphi 0, %s57
    %s77 = sphi 0, %s77
    %s79 = sphi 0, %s77
    %s80 = sphi 0, %s79
    %s94 = sphi 0, %s80
    %s98 = sphi 0, %s98
    %s100 = sphi 0, %s98
    %s101 = sphi 0, %s100
    %s115 = sphi 0, %s101
    %s119 = sphi 0, %s119
    %s121 = sphi 0, %s119
    %s122 = sphi 0, %s121
    %s136 = sphi 0, %s122
    %s140 = sphi 0, %s140
    %s142 = sphi 0, %s140
    %s143 = sphi 0, %s142
    %s157 = sphi 0, %s143
    %s161 = sphi 0, %s161
    %s163 = sphi 0, %s161
    %s164 = sphi 0, %s163
    %s178 = sphi 0, %s164
    %s182 = sphi 0, %s182
    %s184 = sphi 0, %s182
    %s185 = sphi 0, %s184
    %s199 = sphi 0, %s185
    %s203 = sphi 0, %s203
    %s205 = sphi 0, %s203
    %s206 = sphi 0, %s205
    %s220 = sphi 0, %s206
    %s224 = sphi 0, %s224
    %s226 = sphi 0, %s224
    %s227 = sphi 0, %s226
    %s241 = sphi 0, %s227
    %s245 = sphi 0, %s245
    %s247 = sphi 0, %s245
    %s248 = sphi 0, %s247
    %s262 = sphi 0, %s248
    %s268 = sphi 0, %s270
    %s271 = sphi 0, %s268
    %s272 = sphi 0, %s271
    %s288 = sphi 0, %s272
  $region4: #{decoder_forward.1} parent=0 // loop_header_branch
    %20 = sbr.rel (%p18) target = $region8
  $region5: #{decoder_forward.1} parent=0 // loop_body
    %s22 = ssub.s32 %s17, 1
    %s23 = ssub.s32 %s17, 2
    %s24 = sadd.s32 %s17, 1
    %s25 = ssub.s32 %s17, %s24
    %p26 = scmp.eq.s32.totalorder %s25, 0
    %s28 = sadd.s32 %s27, 1
    %s29 = scalar_select %p26, %s27, %s28
    %p32 = pneg %p26
    %p33 = scmp.eq.s32.totalorder %s17, 1
    %p34 = por %p32, %p33
    %p35 = scmp.ne.s32.totalorder %s27, %s30
    %p36 = scmp.eq.s32.totalorder %s17, 0
    %p37 = por %p35, %p36
    %p38 = scmp.ne.s32.totalorder %s27, %s30
    %p39 = scmp.eq.s32.totalorder %s22, 1
    %p40 = por %p38, %p39
    %p41 = scmp.ne.s32.totalorder %s30, %s31
    %p42 = scmp.eq.s32.totalorder %s22, 0
    %p43 = por %p41, %p42
    %p44 = scmp.ne.s32.totalorder %s30, %s31
    %p45 = scmp.eq.s32.totalorder %s23, 1
    %p46 = por %p44, %p45
    %p48 = scmp.ne.s32.totalorder %s31, %s47
    %p49 = scmp.eq.s32.totalorder %s23, 0
    %p50 = por %p48, %p49
    %s51 = ssub.s32 %s17, %s24
    %p52 = scmp.eq.s32.totalorder %s51, 0
    %s54 = sadd.s32 %s53, 1
    %s55 = scalar_select %p52, %s53, %s54
    %p58 = pneg %p52
    %p59 = scmp.eq.s32.totalorder %s17, 1
    %p60 = por %p58, %p59
    %p61 = scmp.ne.s32.totalorder %s53, %s56
    %p62 = scmp.eq.s32.totalorder %s17, 0
    %p63 = por %p61, %p62
    %p64 = scmp.ne.s32.totalorder %s53, %s56
    %p65 = scmp.eq.s32.totalorder %s22, 1
    %p66 = por %p64, %p65
    %p67 = scmp.ne.s32.totalorder %s56, %s57
    %p68 = scmp.eq.s32.totalorder %s22, 0
    %p69 = por %p67, %p68
    %p70 = scmp.ne.s32.totalorder %s56, %s57
    %p71 = scmp.eq.s32.totalorder %s23, 1
    %p72 = por %p70, %p71
    %p74 = scmp.ne.s32.totalorder %s57, %s73
    %p75 = scmp.eq.s32.totalorder %s23, 0
    %p76 = por %p74, %p75
    %s78 = sadd.s32 %s77, 1
    %p81 = scmp.eq.s32.totalorder %s17, 1
    %p82 = scmp.ne.s32.totalorder %s77, %s79
    %p83 = scmp.eq.s32.totalorder %s17, 0
    %p84 = por %p82, %p83
    %p85 = scmp.ne.s32.totalorder %s77, %s79
    %p86 = scmp.eq.s32.totalorder %s22, 1
    %p87 = por %p85, %p86
    %p88 = scmp.ne.s32.totalorder %s79, %s80
    %p89 = scmp.eq.s32.totalorder %s22, 0
    %p90 = por %p88, %p89
    %p91 = scmp.ne.s32.totalorder %s79, %s80
    %p92 = scmp.eq.s32.totalorder %s23, 1
    %p93 = por %p91, %p92
    %p95 = scmp.ne.s32.totalorder %s80, %s94
    %p96 = scmp.eq.s32.totalorder %s23, 0
    %p97 = por %p95, %p96
    %s99 = sadd.s32 %s98, 1
    %p102 = scmp.eq.s32.totalorder %s17, 1
    %p103 = scmp.ne.s32.totalorder %s98, %s100
    %p104 = scmp.eq.s32.totalorder %s17, 0
    %p105 = por %p103, %p104
    %p106 = scmp.ne.s32.totalorder %s98, %s100
    %p107 = scmp.eq.s32.totalorder %s22, 1
    %p108 = por %p106, %p107
    %p109 = scmp.ne.s32.totalorder %s100, %s101
    %p110 = scmp.eq.s32.totalorder %s22, 0
    %p111 = por %p109, %p110
    %p112 = scmp.ne.s32.totalorder %s100, %s101
    %p113 = scmp.eq.s32.totalorder %s23, 1
    %p114 = por %p112, %p113
    %p116 = scmp.ne.s32.totalorder %s101, %s115
    %p117 = scmp.eq.s32.totalorder %s23, 0
    %p118 = por %p116, %p117
    %s120 = sadd.s32 %s119, 1
    %p123 = scmp.eq.s32.totalorder %s17, 1
    %p124 = scmp.ne.s32.totalorder %s119, %s121
    %p125 = scmp.eq.s32.totalorder %s17, 0
    %p126 = por %p124, %p125
    %p127 = scmp.ne.s32.totalorder %s119, %s121
    %p128 = scmp.eq.s32.totalorder %s22, 1
    %p129 = por %p127, %p128
    %p130 = scmp.ne.s32.totalorder %s121, %s122
    %p131 = scmp.eq.s32.totalorder %s22, 0
    %p132 = por %p130, %p131
    %p133 = scmp.ne.s32.totalorder %s121, %s122
    %p134 = scmp.eq.s32.totalorder %s23, 1
    %p135 = por %p133, %p134
    %p137 = scmp.ne.s32.totalorder %s122, %s136
    %p138 = scmp.eq.s32.totalorder %s23, 0
    %p139 = por %p137, %p138
    %s141 = sadd.s32 %s140, 1
    %p144 = scmp.eq.s32.totalorder %s17, 1
    %p145 = scmp.ne.s32.totalorder %s140, %s142
    %p146 = scmp.eq.s32.totalorder %s17, 0
    %p147 = por %p145, %p146
    %p148 = scmp.ne.s32.totalorder %s140, %s142
    %p149 = scmp.eq.s32.totalorder %s22, 1
    %p150 = por %p148, %p149
    %p151 = scmp.ne.s32.totalorder %s142, %s143
    %p152 = scmp.eq.s32.totalorder %s22, 0
    %p153 = por %p151, %p152
    %p154 = scmp.ne.s32.totalorder %s142, %s143
    %p155 = scmp.eq.s32.totalorder %s23, 1
    %p156 = por %p154, %p155
    %p158 = scmp.ne.s32.totalorder %s143, %s157
    %p159 = scmp.eq.s32.totalorder %s23, 0
    %p160 = por %p158, %p159
    %s162 = sadd.s32 %s161, 1
    %p165 = scmp.eq.s32.totalorder %s17, 1
    %p166 = scmp.ne.s32.totalorder %s161, %s163
    %p167 = scmp.eq.s32.totalorder %s17, 0
    %p168 = por %p166, %p167
    %p169 = scmp.ne.s32.totalorder %s161, %s163
    %p170 = scmp.eq.s32.totalorder %s22, 1
    %p171 = por %p169, %p170
    %p172 = scmp.ne.s32.totalorder %s163, %s164
    %p173 = scmp.eq.s32.totalorder %s22, 0
    %p174 = por %p172, %p173
    %p175 = scmp.ne.s32.totalorder %s163, %s164
    %p176 = scmp.eq.s32.totalorder %s23, 1
    %p177 = por %p175, %p176
    %p179 = scmp.ne.s32.totalorder %s164, %s178
    %p180 = scmp.eq.s32.totalorder %s23, 0
    %p181 = por %p179, %p180
    %s183 = sadd.s32 %s182, 1
    %p186 = scmp.eq.s32.totalorder %s17, 1
    %p187 = scmp.ne.s32.totalorder %s182, %s184
    %p188 = scmp.eq.s32.totalorder %s17, 0
    %p189 = por %p187, %p188
    %p190 = scmp.ne.s32.totalorder %s182, %s184
    %p191 = scmp.eq.s32.totalorder %s22, 1
    %p192 = por %p190, %p191
    %p193 = scmp.ne.s32.totalorder %s184, %s185
    %p194 = scmp.eq.s32.totalorder %s22, 0
    %p195 = por %p193, %p194
    %p196 = scmp.ne.s32.totalorder %s184, %s185
    %p197 = scmp.eq.s32.totalorder %s23, 1
    %p198 = por %p196, %p197
    %p200 = scmp.ne.s32.totalorder %s185, %s199
    %p201 = scmp.eq.s32.totalorder %s23, 0
    %p202 = por %p200, %p201
    %s204 = sadd.s32 %s203, 1
    %p207 = scmp.eq.s32.totalorder %s17, 1
    %p208 = scmp.ne.s32.totalorder %s203, %s205
    %p209 = scmp.eq.s32.totalorder %s17, 0
    %p210 = por %p208, %p209
    %p211 = scmp.ne.s32.totalorder %s203, %s205
    %p212 = scmp.eq.s32.totalorder %s22, 1
    %p213 = por %p211, %p212
    %p214 = scmp.ne.s32.totalorder %s205, %s206
    %p215 = scmp.eq.s32.totalorder %s22, 0
    %p216 = por %p214, %p215
    %p217 = scmp.ne.s32.totalorder %s205, %s206
    %p218 = scmp.eq.s32.totalorder %s23, 1
    %p219 = por %p217, %p218
    %p221 = scmp.ne.s32.totalorder %s206, %s220
    %p222 = scmp.eq.s32.totalorder %s23, 0
    %p223 = por %p221, %p222
    %s225 = sadd.s32 %s224, 1
    %p228 = scmp.eq.s32.totalorder %s17, 1
    %p229 = scmp.ne.s32.totalorder %s224, %s226
    %p230 = scmp.eq.s32.totalorder %s17, 0
    %p231 = por %p229, %p230
    %p232 = scmp.ne.s32.totalorder %s224, %s226
    %p233 = scmp.eq.s32.totalorder %s22, 1
    %p234 = por %p232, %p233
    %p235 = scmp.ne.s32.totalorder %s226, %s227
    %p236 = scmp.eq.s32.totalorder %s22, 0
    %p237 = por %p235, %p236
    %p238 = scmp.ne.s32.totalorder %s226, %s227
    %p239 = scmp.eq.s32.totalorder %s23, 1
    %p240 = por %p238, %p239
    %p242 = scmp.ne.s32.totalorder %s227, %s241
    %p243 = scmp.eq.s32.totalorder %s23, 0
    %p244 = por %p242, %p243
    %s246 = sadd.s32 %s245, 1
    %p249 = scmp.eq.s32.totalorder %s17, 1
    %p250 = scmp.ne.s32.totalorder %s245, %s247
    %p251 = scmp.eq.s32.totalorder %s17, 0
    %p252 = por %p250, %p251
    %p253 = scmp.ne.s32.totalorder %s245, %s247
    %p254 = scmp.eq.s32.totalorder %s22, 1
    %p255 = por %p253, %p254
    %p256 = scmp.ne.s32.totalorder %s247, %s248
    %p257 = scmp.eq.s32.totalorder %s22, 0
    %p258 = por %p256, %p257
    %p259 = scmp.ne.s32.totalorder %s247, %s248
    %p260 = scmp.eq.s32.totalorder %s23, 1
    %p261 = por %p259, %p260
    %p263 = scmp.ne.s32.totalorder %s248, %s262
    %p264 = scmp.eq.s32.totalorder %s23, 0
    %p265 = por %p263, %p264
    %s266 = ssub.s32 %s17, %s24
    %p267 = scmp.eq.s32.totalorder %s266, 0
    %s269 = sadd.s32 %s268, 1
    %s270 = scalar_select %p267, %s268, %s269
    %p273 = pneg %p267
    %p274 = scmp.eq.s32.totalorder %s17, 1
    %p275 = por %p273, %p274
    %p276 = scmp.ne.s32.totalorder %s268, %s271
    %p277 = scmp.eq.s32.totalorder %s17, 0
    %p278 = por %p276, %p277
    %p279 = scmp.ne.s32.totalorder %s268, %s271
    %p280 = scmp.eq.s32.totalorder %s22, 1
    %p281 = por %p279, %p280
    %p282 = scmp.ne.s32.totalorder %s271, %s272
    %p283 = scmp.eq.s32.totalorder %s22, 0
    %p284 = por %p282, %p283
    %p285 = scmp.ne.s32.totalorder %s271, %s272
    %p286 = scmp.eq.s32.totalorder %s23, 1
    %p287 = por %p285, %p286
    %p289 = scmp.ne.s32.totalorder %s272, %s288
    %p290 = scmp.eq.s32.totalorder %s23, 0
    %p291 = por %p289, %p290
    %p292 = scmp.le.s32.totalorder 1, %s17
    %p293 = scmp.lt.s32.totalorder %s17, 3
    %p294 = pnand %p292, %p293
    %p295 = pneg %p294
    // Predicated region
    $region9: #{decoder_forward.1} parent=5 // pred_check
      _
    $region10: #{decoder_forward.1} parent=5 // pred_check_branch
      %297 = sbr.rel (%p294) target = $region12
    $region11: #{decoder_forward.1} parent=5 // pred_region
      %s298 = ssub.s32 %s17, 1
      // Predicated region
      $region13: #{decoder_forward.1} parent=11 // pred_check
        %p299 = pneg %p90
      $region14: #{decoder_forward.1} parent=11 // pred_check_branch
        %301 = sbr.rel (%p299) target = $region16
      $region15: #{decoder_forward.1} parent=11 // pred_region
        _
      $region16: #{decoder_forward.1} parent=11 // pred_fallthru
        _
      // Predicated region
      $region17: #{decoder_forward.1} parent=11 // pred_check
        %p302 = pneg %p111
      $region18: #{decoder_forward.1} parent=11 // pred_check_branch
        %304 = sbr.rel (%p302) target = $region20
      $region19: #{decoder_forward.1} parent=11 // pred_region
        _
      $region20: #{decoder_forward.1} parent=11 // pred_fallthru
        _
      // Predicated region
      $region21: #{decoder_forward.1} parent=11 // pred_check
        %p305 = pneg %p132
      $region22: #{decoder_forward.1} parent=11 // pred_check_branch
        %307 = sbr.rel (%p305) target = $region24
      $region23: #{decoder_forward.1} parent=11 // pred_region
        _
      $region24: #{decoder_forward.1} parent=11 // pred_fallthru
        _
      // Predicated region
      $region25: #{decoder_forward.1} parent=11 // pred_check
        %p308 = pneg %p153
      $region26: #{decoder_forward.1} parent=11 // pred_check_branch
        %310 = sbr.rel (%p308) target = $region28
      $region27: #{decoder_forward.1} parent=11 // pred_region
        _
      $region28: #{decoder_forward.1} parent=11 // pred_fallthru
        _
      // Predicated region
      $region29: #{decoder_forward.1} parent=11 // pred_check
        %p311 = pneg %p174
      $region30: #{decoder_forward.1} parent=11 // pred_check_branch
        %313 = sbr.rel (%p311) target = $region32
      $region31: #{decoder_forward.1} parent=11 // pred_region
        _
      $region32: #{decoder_forward.1} parent=11 // pred_fallthru
        _
      // Predicated region
      $region33: #{decoder_forward.1} parent=11 // pred_check
        %p314 = pneg %p195
      $region34: #{decoder_forward.1} parent=11 // pred_check_branch
        %316 = sbr.rel (%p314) target = $region36
      $region35: #{decoder_forward.1} parent=11 // pred_region
        _
      $region36: #{decoder_forward.1} parent=11 // pred_fallthru
        _
      // Predicated region
      $region37: #{decoder_forward.1} parent=11 // pred_check
        %p317 = pneg %p216
      $region38: #{decoder_forward.1} parent=11 // pred_check_branch
        %319 = sbr.rel (%p317) target = $region40
      $region39: #{decoder_forward.1} parent=11 // pred_region
        _
      $region40: #{decoder_forward.1} parent=11 // pred_fallthru
        _
      // Predicated region
      $region41: #{decoder_forward.1} parent=11 // pred_check
        %p320 = pneg %p237
      $region42: #{decoder_forward.1} parent=11 // pred_check_branch
        %322 = sbr.rel (%p320) target = $region44
      $region43: #{decoder_forward.1} parent=11 // pred_region
        _
      $region44: #{decoder_forward.1} parent=11 // pred_fallthru
        _
      // Predicated region
      $region45: #{decoder_forward.1} parent=11 // pred_check
        %p323 = pneg %p258
      $region46: #{decoder_forward.1} parent=11 // pred_check_branch
        %325 = sbr.rel (%p323) target = $region48
      $region47: #{decoder_forward.1} parent=11 // pred_region
        _
      $region48: #{decoder_forward.1} parent=11 // pred_fallthru
        _
    $region12: #{decoder_forward.1} parent=5 // pred_fallthru
      _
    %p326 = scmp.lt.s32.totalorder %s17, 2
    // Predicated region
    $region49: #{decoder_forward.1} parent=5 // pred_check
      %p327 = pneg %p326
    $region50: #{decoder_forward.1} parent=5 // pred_check_branch
      %329 = sbr.rel (%p327) target = $region52
    $region51: #{decoder_forward.1} parent=5 // pred_region
      // Predicated region
      $region53: #{decoder_forward.1} parent=51 // pred_check
        %p330 = pneg %p37
      $region54: #{decoder_forward.1} parent=51 // pred_check_branch
        %332 = sbr.rel (%p330) target = $region56
      $region55: #{decoder_forward.1} parent=51 // pred_region
        %s333 = smul.u32 32, %s17
        %p334 = scmp.lt.s32.totalorder %s333, 63
        %s335 = scalar_select %p334, %s333, 63
        %s336 = smul.addr %s335, 8
        %s337 = scalar_lea.vmem %s0, %s336
        %s338 = smul.u32 32, %s17
      $region56: #{decoder_forward.1} parent=51 // pred_fallthru
        _
      // Predicated region
      $region57: #{decoder_forward.1} parent=51 // pred_check
        %p339 = pneg %p63
      $region58: #{decoder_forward.1} parent=51 // pred_check_branch
        %341 = sbr.rel (%p339) target = $region60
      $region59: #{decoder_forward.1} parent=51 // pred_region
        %s342 = smul.u32 32, %s17
        %p343 = scmp.lt.s32.totalorder %s342, 63
        %s344 = scalar_select %p343, %s342, 63
        %s345 = smul.addr %s344, 8
        %s346 = scalar_lea.vmem %s1, %s345
        %s347 = smul.u32 32, %s17
      $region60: #{decoder_forward.1} parent=51 // pred_fallthru
        _
    $region52: #{decoder_forward.1} parent=5 // pred_fallthru
      _
    %p348 = scmp.le.s32.totalorder 1, %s17
    %p349 = scmp.lt.s32.totalorder %s17, 3
    %p350 = pnand %p348, %p349
    %p351 = pneg %p350
    // Predicated region
    $region61: #{decoder_forward.1} parent=5 // pred_check
      _
    $region62: #{decoder_forward.1} parent=5 // pred_check_branch
      %353 = sbr.rel (%p350) target = $region64
    $region63: #{decoder_forward.1} parent=5 // pred_region
      %s354 = ssub.s32 %s17, 1
      %s355 = smul.u32 32, %s22
      %p356 = scmp.lt.s32.totalorder %s355, 63
      %s357 = scalar_select %p356, %s355, 63
      %s358 = smul.addr %s357, 8
      %s359 = scalar_lea.vmem %s0, %s358
      %p360 = pneg %p43
      %p361 = pneg %p40
      %s362 = smul.u32 32, %s22
      %p363 = scmp.lt.s32.totalorder %s362, 63
      %s364 = scalar_select %p363, %s362, 63
      %s365 = smul.addr %s364, 8
      %s366 = scalar_lea.vmem %s1, %s365
      %p367 = pneg %p69
      %p368 = pneg %p66
      %p369 = pneg %p90
      %p370 = pneg %p87
      %p371 = pneg %p111
      %p372 = pneg %p108
      %p373 = pneg %p132
      %p374 = pneg %p129
      %p375 = pneg %p153
      %p376 = pneg %p150
      %p377 = pneg %p174
      %p378 = pneg %p171
      %p379 = pneg %p195
      %p380 = pneg %p192
      %p381 = pneg %p216
      %p382 = pneg %p213
      %p383 = pneg %p237
      %p384 = pneg %p234
      %p385 = pneg %p258
      %p386 = pneg %p255
      %p387 = pneg %p284
      %p388 = pneg %p281
      %s389 = smul.u32 32, %s22
      %p390 = scmp.lt.s32.totalorder %s389, 63
      %s391 = scalar_select %p390, %s389, 63
      %s392 = smul.addr %s391, 8
      %s393 = scalar_lea.vmem %s11, %s392
      %s394 = smul.u32 32, %s22
      %p395 = scmp.lt.s32.totalorder %s394, 63
      %s396 = scalar_select %p395, %s394, 63
      %s397 = smul.addr %s396, 8
      %s398 = scalar_lea.vmem %s0, %s397
      %s399 = smul.u32 32, %s22
      %s400 = smul.u32 32, %s22
      %p401 = scmp.lt.s32.totalorder %s400, 63
      %s402 = scalar_select %p401, %s400, 63
      %s403 = smul.addr %s402, 8
      %s404 = scalar_lea.vmem %s1, %s403
      %s405 = smul.u32 32, %s22
      %s406 = smul.u32 32, %s22
      %p407 = scmp.lt.s32.totalorder %s406, 63
      %s408 = scalar_select %p407, %s406, 63
      %s409 = smul.addr %s408, 8
      %s410 = scalar_lea.vmem %s11, %s409
      %s411 = smul.u32 32, %s22
      %v413 = vld [vmem:[%s398] sm:$0xff]
      %v414 = vld [vmem:[%s398 + $0x8] sm:$0xff]
      %v415 = vld [vmem:[%s398 + $0x10] sm:$0xff]
      %v416 = vld [vmem:[%s398 + $0x18] sm:$0xff]
      %v417 = vld [vmem:[%s398 + $0x20] sm:$0xff]
      %v418 = vld [vmem:[%s398 + $0x28] sm:$0xff]
      %v419 = vld [vmem:[%s398 + $0x30] sm:$0xff]
      %v420 = vld [vmem:[%s398 + $0x38] sm:$0xff]
      %v421 = vld [vmem:[%s398 + $0x40] sm:$0xff]
      %v422 = vld [vmem:[%s398 + $0x48] sm:$0xff]
      %v423 = vld [vmem:[%s398 + $0x50] sm:$0xff]
      %v424 = vld [vmem:[%s398 + $0x58] sm:$0xff]
      %v425 = vld [vmem:[%s398 + $0x60] sm:$0xff]
      %v426 = vld [vmem:[%s398 + $0x68] sm:$0xff]
      %v427 = vld [vmem:[%s398 + $0x70] sm:$0xff]
      %v428 = vld [vmem:[%s398 + $0x78] sm:$0xff]
      %v429 = vld [vmem:[%s398 + $0x80] sm:$0xff]
      %v430 = vld [vmem:[%s398 + $0x88] sm:$0xff]
      %v431 = vld [vmem:[%s398 + $0x90] sm:$0xff]
      %v432 = vld [vmem:[%s398 + $0x98] sm:$0xff]
      %v433 = vld [vmem:[%s398 + $0xa0] sm:$0xff]
      %v434 = vld [vmem:[%s398 + $0xa8] sm:$0xff]
      %v435 = vld [vmem:[%s398 + $0xb0] sm:$0xff]
      %v436 = vld [vmem:[%s398 + $0xb8] sm:$0xff]
      %v437 = vld [vmem:[%s398 + $0xc0] sm:$0xff]
      %v438 = vld [vmem:[%s398 + $0xc8] sm:$0xff]
      %v439 = vld [vmem:[%s398 + $0xd0] sm:$0xff]
      %v440 = vld [vmem:[%s398 + $0xd8] sm:$0xff]
      %v441 = vld [vmem:[%s398 + $0xe0] sm:$0xff]
      %v442 = vld [vmem:[%s398 + $0xe8] sm:$0xff]
      %v443 = vld [vmem:[%s398 + $0xf0] sm:$0xff]
      %v444 = vld [vmem:[%s398 + $0xf8] sm:$0xff]
      %v445 = vpack.c.bf16 %v414, %v413
      %v446 = vpack.c.bf16 %v416, %v415
      %v447 = vpack.c.bf16 %v418, %v417
      %v448 = vpack.c.bf16 %v420, %v419
      %v449 = vpack.c.bf16 %v422, %v421
      %v450 = vpack.c.bf16 %v424, %v423
      %v451 = vpack.c.bf16 %v426, %v425
      %v452 = vpack.c.bf16 %v428, %v427
      %v453 = vpack.c.bf16 %v430, %v429
      %v454 = vpack.c.bf16 %v432, %v431
      %v455 = vpack.c.bf16 %v434, %v433
      %v456 = vpack.c.bf16 %v436, %v435
      %v457 = vpack.c.bf16 %v438, %v437
      %v458 = vpack.c.bf16 %v440, %v439
      %v459 = vpack.c.bf16 %v442, %v441
      %v460 = vpack.c.bf16 %v444, %v443
      %v461 = vld [vmem:[%s404] sm:$0xff]
      %v462 = vld [vmem:[%s404 + $0x8] sm:$0xff]
      %v463 = vld [vmem:[%s404 + $0x10] sm:$0xff]
      %v464 = vld [vmem:[%s404 + $0x18] sm:$0xff]
      %v465 = vld [vmem:[%s404 + $0x20] sm:$0xff]
      %v466 = vld [vmem:[%s404 + $0x28] sm:$0xff]
      %v467 = vld [vmem:[%s404 + $0x30] sm:$0xff]
      %v468 = vld [vmem:[%s404 + $0x38] sm:$0xff]
      %v469 = vld [vmem:[%s404 + $0x40] sm:$0xff]
      %v470 = vld [vmem:[%s404 + $0x48] sm:$0xff]
      %v471 = vld [vmem:[%s404 + $0x50] sm:$0xff]
      %v472 = vld [vmem:[%s404 + $0x58] sm:$0xff]
      %v473 = vld [vmem:[%s404 + $0x60] sm:$0xff]
      %v474 = vld [vmem:[%s404 + $0x68] sm:$0xff]
      %v475 = vld [vmem:[%s404 + $0x70] sm:$0xff]
      %v476 = vld [vmem:[%s404 + $0x78] sm:$0xff]
      %v477 = vld [vmem:[%s404 + $0x80] sm:$0xff]
      %v478 = vld [vmem:[%s404 + $0x88] sm:$0xff]
      %v479 = vld [vmem:[%s404 + $0x90] sm:$0xff]
      %v480 = vld [vmem:[%s404 + $0x98] sm:$0xff]
      %v481 = vld [vmem:[%s404 + $0xa0] sm:$0xff]
      %v482 = vld [vmem:[%s404 + $0xa8] sm:$0xff]
      %v483 = vld [vmem:[%s404 + $0xb0] sm:$0xff]
      %v484 = vld [vmem:[%s404 + $0xb8] sm:$0xff]
      %v485 = vld [vmem:[%s404 + $0xc0] sm:$0xff]
      %v486 = vld [vmem:[%s404 + $0xc8] sm:$0xff]
      %v487 = vld [vmem:[%s404 + $0xd0] sm:$0xff]
      %v488 = vld [vmem:[%s404 + $0xd8] sm:$0xff]
      %v489 = vld [vmem:[%s404 + $0xe0] sm:$0xff]
      %v490 = vld [vmem:[%s404 + $0xe8] sm:$0xff]
      %v491 = vld [vmem:[%s404 + $0xf0] sm:$0xff]
      %v492 = vld [vmem:[%s404 + $0xf8] sm:$0xff]
      %v493 = vpack.c.bf16 %v462, %v461
      %v494 = vpack.c.bf16 %v464, %v463
      %v495 = vpack.c.bf16 %v466, %v465
      %v496 = vpack.c.bf16 %v468, %v467
      %v497 = vpack.c.bf16 %v470, %v469
      %v498 = vpack.c.bf16 %v472, %v471
      %v499 = vpack.c.bf16 %v474, %v473
      %v500 = vpack.c.bf16 %v476, %v475
      %v501 = vpack.c.bf16 %v478, %v477
      %v502 = vpack.c.bf16 %v480, %v479
      %v503 = vpack.c.bf16 %v482, %v481
      %v504 = vpack.c.bf16 %v484, %v483
      %v505 = vpack.c.bf16 %v486, %v485
      %v506 = vpack.c.bf16 %v488, %v487
      %v507 = vpack.c.bf16 %v490, %v489
      %v508 = vpack.c.bf16 %v492, %v491
      %v509 = vld [vmem:[%s2] sm:$0xf]
      %v510 = vld [vmem:[%s2 + $0x4] sm:$0xf]
      %v511 = vld [vmem:[%s3] sm:$0xf]
      %vm512 = vcmask 64512
      %v514 = vsel %vm512, %v493, 0
      %v517 = vsel %vm512, %v494, 0
      %v520 = vsel %vm512, %v495, 0
      %v523 = vsel %vm512, %v496, 0
      %v526 = vsel %vm512, %v497, 0
      %v529 = vsel %vm512, %v498, 0
      %v532 = vsel %vm512, %v499, 0
      %v535 = vsel %vm512, %v500, 0
      %v538 = vsel %vm512, %v501, 0
      %v541 = vsel %vm512, %v502, 0
      %v544 = vsel %vm512, %v503, 0
      %v547 = vsel %vm512, %v504, 0
      %v550 = vsel %vm512, %v505, 0
      %v553 = vsel %vm512, %v506, 0
      %v556 = vsel %vm512, %v507, 0
      %v559 = vsel %vm512, %v508, 0
      %vm561 = vcmask 1043456
      %v563 = vsel %vm561, %v511, 0
      %565 = vmatpush.bf16.msra.mxu0 0
      %566 = vmatpush.bf16.msra.mxu0 0
      %567 = vmatpush.bf16.msra.mxu0 0
      %568 = vmatpush.bf16.msra.mxu0 0
      %569 = vmatpush.bf16.msra.mxu0 0
      %570 = vmatpush.bf16.msra.mxu0 0
      %571 = vmatpush.bf16.msra.mxu0 0
      %572 = vmatpush.bf16.msra.mxu0 %v563
      %573 = vmatmul.bf16.gmra.mxu0 %v514
      %v574 = vpop.f32.mrf.mxu0
      %v575 = vadd.f32 0.0, %v574
      %v576 = vpop.f32.mrf.mxu0
      %v577 = vadd.f32 0.0, %v576
      %578 = vmatmul.bf16.gmra.mxu0 %v517
      %v579 = vpop.f32.mrf.mxu0
      %v580 = vadd.f32 0.0, %v579
      %v581 = vpop.f32.mrf.mxu0
      %v582 = vadd.f32 0.0, %v581
      %583 = vmatmul.bf16.gmra.mxu0 %v520
      %v584 = vpop.f32.mrf.mxu0
      %v585 = vadd.f32 0.0, %v584
      %v586 = vpop.f32.mrf.mxu0
      %v587 = vadd.f32 0.0, %v586
      %588 = vmatmul.bf16.gmra.mxu0 %v523
      %v589 = vpop.f32.mrf.mxu0
      %v590 = vadd.f32 0.0, %v589
      %v591 = vpop.f32.mrf.mxu0
      %v592 = vadd.f32 0.0, %v591
      %593 = vmatmul.bf16.gmra.mxu0 %v526
      %v594 = vpop.f32.mrf.mxu0
      %v595 = vadd.f32 0.0, %v594
      %v596 = vpop.f32.mrf.mxu0
      %v597 = vadd.f32 0.0, %v596
      %598 = vmatmul.bf16.gmra.mxu0 %v529
      %v599 = vpop.f32.mrf.mxu0
      %v600 = vadd.f32 0.0, %v599
      %v601 = vpop.f32.mrf.mxu0
      %v602 = vadd.f32 0.0, %v601
      %603 = vmatmul.bf16.gmra.mxu0 %v532
      %v604 = vpop.f32.mrf.mxu0
      %v605 = vadd.f32 0.0, %v604
      %v606 = vpop.f32.mrf.mxu0
      %v607 = vadd.f32 0.0, %v606
      %608 = vmatmul.bf16.gmra.mxu0 %v535
      %v609 = vpop.f32.mrf.mxu0
      %v610 = vadd.f32 0.0, %v609
      %v611 = vpop.f32.mrf.mxu0
      %v612 = vadd.f32 0.0, %v611
      %613 = vmatmul.bf16.gmra.mxu0 %v538
      %v614 = vpop.f32.mrf.mxu0
      %v615 = vadd.f32 0.0, %v614
      %v616 = vpop.f32.mrf.mxu0
      %v617 = vadd.f32 0.0, %v616
      %618 = vmatmul.bf16.gmra.mxu0 %v541
      %v619 = vpop.f32.mrf.mxu0
      %v620 = vadd.f32 0.0, %v619
      %v621 = vpop.f32.mrf.mxu0
      %v622 = vadd.f32 0.0, %v621
      %623 = vmatmul.bf16.gmra.mxu0 %v544
      %v624 = vpop.f32.mrf.mxu0
      %v625 = vadd.f32 0.0, %v624
      %v626 = vpop.f32.mrf.mxu0
      %v627 = vadd.f32 0.0, %v626
      %628 = vmatmul.bf16.gmra.mxu0 %v547
      %v629 = vpop.f32.mrf.mxu0
      %v630 = vadd.f32 0.0, %v629
      %v631 = vpop.f32.mrf.mxu0
      %v632 = vadd.f32 0.0, %v631
      %633 = vmatmul.bf16.gmra.mxu0 %v550
      %v634 = vpop.f32.mrf.mxu0
      %v635 = vadd.f32 0.0, %v634
      %v636 = vpop.f32.mrf.mxu0
      %v637 = vadd.f32 0.0, %v636
      %638 = vmatmul.bf16.gmra.mxu0 %v553
      %v639 = vpop.f32.mrf.mxu0
      %v640 = vadd.f32 0.0, %v639
      %v641 = vpop.f32.mrf.mxu0
      %v642 = vadd.f32 0.0, %v641
      %643 = vmatmul.bf16.gmra.mxu0 %v556
      %v644 = vpop.f32.mrf.mxu0
      %v645 = vadd.f32 0.0, %v644
      %v646 = vpop.f32.mrf.mxu0
      %v647 = vadd.f32 0.0, %v646
      %648 = vmatmul.bf16.gmra.mxu0 %v559
      %v649 = vpop.f32.mrf.mxu0
      %v650 = vadd.f32 0.0, %v649
      %v651 = vpop.f32.mrf.mxu0
      %v652 = vadd.f32 0.0, %v651
      %653 = vdwg.mxu0
      %v656 = vunpack.c.l.b16 %v509
      %v657 = vunpack.c.l.b16 %v510
      %v658 = vpack.c.b16 %v657, %v656
      %vm660 = vcmask 130048
      %v662 = vsel %vm660, %v445, 0
      %v665 = vsel %vm660, %v446, 0
      %v668 = vsel %vm660, %v447, 0
      %v671 = vsel %vm660, %v448, 0
      %v674 = vsel %vm660, %v449, 0
      %v677 = vsel %vm660, %v450, 0
      %v680 = vsel %vm660, %v451, 0
      %v683 = vsel %vm660, %v452, 0
      %v686 = vsel %vm660, %v453, 0
      %v689 = vsel %vm660, %v454, 0
      %v692 = vsel %vm660, %v455, 0
      %v695 = vsel %vm660, %v456, 0
      %v698 = vsel %vm660, %v457, 0
      %v701 = vsel %vm660, %v458, 0
      %v704 = vsel %vm660, %v459, 0
      %v707 = vsel %vm660, %v460, 0
      %709 = vmatpush.bf16.msra.mxu0 0
      %710 = vmatpush.bf16.msra.mxu0 0
      %711 = vmatpush.bf16.msra.mxu0 0
      %712 = vmatpush.bf16.msra.mxu0 0
      %713 = vmatpush.bf16.msra.mxu0 0
      %714 = vmatpush.bf16.msra.mxu0 0
      %715 = vmatpush.bf16.msra.mxu0 0
      %716 = vmatpush.bf16.msra.mxu0 %v658
      %717 = vmatmul.bf16.gmra.mxu0 %v662
      %v718 = vpop.f32.mrf.mxu0
      %v719 = vadd.f32 %v575, %v718
      %v720 = vpop.f32.mrf.mxu0
      %v721 = vadd.f32 %v577, %v720
      %722 = vmatmul.bf16.gmra.mxu0 %v665
      %v723 = vpop.f32.mrf.mxu0
      %v724 = vadd.f32 %v580, %v723
      %v725 = vpop.f32.mrf.mxu0
      %v726 = vadd.f32 %v582, %v725
      %727 = vmatmul.bf16.gmra.mxu0 %v668
      %v728 = vpop.f32.mrf.mxu0
      %v729 = vadd.f32 %v585, %v728
      %v730 = vpop.f32.mrf.mxu0
      %v731 = vadd.f32 %v587, %v730
      %732 = vmatmul.bf16.gmra.mxu0 %v671
      %v733 = vpop.f32.mrf.mxu0
      %v734 = vadd.f32 %v590, %v733
      %v735 = vpop.f32.mrf.mxu0
      %v736 = vadd.f32 %v592, %v735
      %737 = vmatmul.bf16.gmra.mxu0 %v674
      %v738 = vpop.f32.mrf.mxu0
      %v739 = vadd.f32 %v595, %v738
      %v740 = vpop.f32.mrf.mxu0
      %v741 = vadd.f32 %v597, %v740
      %742 = vmatmul.bf16.gmra.mxu0 %v677
      %v743 = vpop.f32.mrf.mxu0
      %v744 = vadd.f32 %v600, %v743
      %v745 = vpop.f32.mrf.mxu0
      %v746 = vadd.f32 %v602, %v745
      %747 = vmatmul.bf16.gmra.mxu0 %v680
      %v748 = vpop.f32.mrf.mxu0
      %v749 = vadd.f32 %v605, %v748
      %v750 = vpop.f32.mrf.mxu0
      %v751 = vadd.f32 %v607, %v750
      %752 = vmatmul.bf16.gmra.mxu0 %v683
      %v753 = vpop.f32.mrf.mxu0
      %v754 = vadd.f32 %v610, %v753
      %v755 = vpop.f32.mrf.mxu0
      %v756 = vadd.f32 %v612, %v755
      %757 = vmatmul.bf16.gmra.mxu0 %v686
      %v758 = vpop.f32.mrf.mxu0
      %v759 = vadd.f32 %v615, %v758
      %v760 = vpop.f32.mrf.mxu0
      %v761 = vadd.f32 %v617, %v760
      %762 = vmatmul.bf16.gmra.mxu0 %v689
      %v763 = vpop.f32.mrf.mxu0
      %v764 = vadd.f32 %v620, %v763
      %v765 = vpop.f32.mrf.mxu0
      %v766 = vadd.f32 %v622, %v765
      %767 = vmatmul.bf16.gmra.mxu0 %v692
      %v768 = vpop.f32.mrf.mxu0
      %v769 = vadd.f32 %v625, %v768
      %v770 = vpop.f32.mrf.mxu0
      %v771 = vadd.f32 %v627, %v770
      %772 = vmatmul.bf16.gmra.mxu0 %v695
      %v773 = vpop.f32.mrf.mxu0
      %v774 = vadd.f32 %v630, %v773
      %v775 = vpop.f32.mrf.mxu0
      %v776 = vadd.f32 %v632, %v775
      %777 = vmatmul.bf16.gmra.mxu0 %v698
      %v778 = vpop.f32.mrf.mxu0
      %v779 = vadd.f32 %v635, %v778
      %v780 = vpop.f32.mrf.mxu0
      %v781 = vadd.f32 %v637, %v780
      %782 = vmatmul.bf16.gmra.mxu0 %v701
      %v783 = vpop.f32.mrf.mxu0
      %v784 = vadd.f32 %v640, %v783
      %v785 = vpop.f32.mrf.mxu0
      %v786 = vadd.f32 %v642, %v785
      %787 = vmatmul.bf16.gmra.mxu0 %v704
      %v788 = vpop.f32.mrf.mxu0
      %v789 = vadd.f32 %v645, %v788
      %v790 = vpop.f32.mrf.mxu0
      %v791 = vadd.f32 %v647, %v790
      %792 = vmatmul.bf16.gmra.mxu0 %v707
      %v793 = vpop.f32.mrf.mxu0
      %v794 = vadd.f32 %v650, %v793
      %v795 = vpop.f32.mrf.mxu0
      %v796 = vadd.f32 %v652, %v795
      %797 = vdwg.mxu0
      %v798 = vld [vmem:[%s4] sm:$0x1]
      %v800 = vperm.slane %v798, 0
      %v802 = vadd.f32 %v719, %v800
      %v803 = vadd.f32 %v721, %v800
      %v804 = vadd.f32 %v724, %v800
      %v805 = vadd.f32 %v726, %v800
      %v806 = vadd.f32 %v729, %v800
      %v807 = vadd.f32 %v731, %v800
      %v808 = vadd.f32 %v734, %v800
      %v809 = vadd.f32 %v736, %v800
      %v810 = vadd.f32 %v739, %v800
      %v811 = vadd.f32 %v741, %v800
      %v812 = vadd.f32 %v744, %v800
      %v813 = vadd.f32 %v746, %v800
      %v814 = vadd.f32 %v749, %v800
      %v815 = vadd.f32 %v751, %v800
      %v816 = vadd.f32 %v754, %v800
      %v817 = vadd.f32 %v756, %v800
      %v818 = vadd.f32 %v759, %v800
      %v819 = vadd.f32 %v761, %v800
      %v820 = vadd.f32 %v764, %v800
      %v821 = vadd.f32 %v766, %v800
      %v822 = vadd.f32 %v769, %v800
      %v823 = vadd.f32 %v771, %v800
      %v824 = vadd.f32 %v774, %v800
      %v825 = vadd.f32 %v776, %v800
      %v826 = vadd.f32 %v779, %v800
      %v827 = vadd.f32 %v781, %v800
      %v828 = vadd.f32 %v784, %v800
      %v829 = vadd.f32 %v786, %v800
      %v830 = vadd.f32 %v789, %v800
      %v831 = vadd.f32 %v791, %v800
      %v832 = vadd.f32 %v794, %v800
      %v833 = vadd.f32 %v796, %v800
      %v834 = vtanh.pop %v802
      %v835 = vtanh.pop %v803
      %v836 = vtanh.pop %v804
      %v837 = vtanh.pop %v805
      %v838 = vtanh.pop %v806
      %v839 = vtanh.pop %v807
      %v840 = vtanh.pop %v808
      %v841 = vtanh.pop %v809
      %v842 = vtanh.pop %v810
      %v843 = vtanh.pop %v811
      %v844 = vtanh.pop %v812
      %v845 = vtanh.pop %v813
      %v846 = vtanh.pop %v814
      %v847 = vtanh.pop %v815
      %v848 = vtanh.pop %v816
      %v849 = vtanh.pop %v817
      %v850 = vtanh.pop %v818
      %v851 = vtanh.pop %v819
      %v852 = vtanh.pop %v820
      %v853 = vtanh.pop %v821
      %v854 = vtanh.pop %v822
      %v855 = vtanh.pop %v823
      %v856 = vtanh.pop %v824
      %v857 = vtanh.pop %v825
      %v858 = vtanh.pop %v826
      %v859 = vtanh.pop %v827
      %v860 = vtanh.pop %v828
      %v861 = vtanh.pop %v829
      %v862 = vtanh.pop %v830
      %v863 = vtanh.pop %v831
      %v864 = vtanh.pop %v832
      %v865 = vtanh.pop %v833
      %v866 = vpack.c.bf16 %v835, %v834
      %v867 = vpack.c.bf16 %v837, %v836
      %v868 = vpack.c.bf16 %v839, %v838
      %v869 = vpack.c.bf16 %v841, %v840
      %v870 = vpack.c.bf16 %v843, %v842
      %v871 = vpack.c.bf16 %v845, %v844
      %v872 = vpack.c.bf16 %v847, %v846
      %v873 = vpack.c.bf16 %v849, %v848
      %v874 = vpack.c.bf16 %v851, %v850
      %v875 = vpack.c.bf16 %v853, %v852
      %v876 = vpack.c.bf16 %v855, %v854
      %v877 = vpack.c.bf16 %v857, %v856
      %v878 = vpack.c.bf16 %v859, %v858
      %v879 = vpack.c.bf16 %v861, %v860
      %v880 = vpack.c.bf16 %v863, %v862
      %v881 = vpack.c.bf16 %v865, %v864
      %v882 = vld [vmem:[%s5] sm:$0xf]
      %v883 = vld [vmem:[%s5 + $0x4] sm:$0xf]
      %v884 = vld [vmem:[%s5 + $0x8] sm:$0xf]
      %v885 = vld [vmem:[%s5 + $0xc] sm:$0xf]
      %v886 = vld [vmem:[%s5 + $0x10] sm:$0xf]
      %v887 = vld [vmem:[%s5 + $0x14] sm:$0xf]
      %v888 = vld [vmem:[%s5 + $0x18] sm:$0xf]
      %v889 = vld [vmem:[%s5 + $0x1c] sm:$0xf]
      %v890 = vld [vmem:[%s5 + $0x20] sm:$0xf]
      %v891 = vld [vmem:[%s5 + $0x24] sm:$0xf]
      %v892 = vld [vmem:[%s5 + $0x28] sm:$0xf]
      %v893 = vld [vmem:[%s5 + $0x2c] sm:$0xf]
      %v894 = vld [vmem:[%s5 + $0x30] sm:$0xf]
      %v895 = vld [vmem:[%s5 + $0x34] sm:$0xf]
      %v896 = vld [vmem:[%s5 + $0x38] sm:$0xf]
      %v897 = vld [vmem:[%s5 + $0x3c] sm:$0xf]
      %v898 = vld [vmem:[%s6] sm:$0x1]
      %v900 = vperm.slane %v898, 0
      %v918 = vunpack.c.l.b16 %v882
      %v919 = vunpack.c.l.b16 %v883
      %v920 = vunpack.c.l.b16 %v884
      %v921 = vunpack.c.l.b16 %v885
      %v922 = vunpack.c.l.b16 %v886
      %v923 = vunpack.c.l.b16 %v887
      %v924 = vunpack.c.l.b16 %v888
      %v925 = vunpack.c.l.b16 %v889
      %v926 = vunpack.c.l.b16 %v890
      %v927 = vunpack.c.l.b16 %v891
      %v928 = vunpack.c.l.b16 %v892
      %v929 = vunpack.c.l.b16 %v893
      %v930 = vunpack.c.l.b16 %v894
      %v931 = vunpack.c.l.b16 %v895
      %v932 = vunpack.c.l.b16 %v896
      %v933 = vunpack.c.l.b16 %v897
      %v934 = vpack.c.b16 %v919, %v918
      %v935 = vpack.c.b16 %v921, %v920
      %v936 = vpack.c.b16 %v923, %v922
      %v937 = vpack.c.b16 %v925, %v924
      %v938 = vpack.c.b16 %v927, %v926
      %v939 = vpack.c.b16 %v929, %v928
      %v940 = vpack.c.b16 %v931, %v930
      %v941 = vpack.c.b16 %v933, %v932
      %950 = vmatpush.bf16.msra.mxu0 %v941
      %951 = vmatpush.bf16.msra.mxu0 %v940
      %952 = vmatpush.bf16.msra.mxu0 %v939
      %953 = vmatpush.bf16.msra.mxu0 %v938
      %954 = vmatpush.bf16.msra.mxu0 %v937
      %955 = vmatpush.bf16.msra.mxu0 %v936
      %956 = vmatpush.bf16.msra.mxu0 %v935
      %957 = vmatpush.bf16.msra.mxu0 %v934
      %958 = vmatmul.bf16.gmra.mxu0 %v866
      %v959 = vpop.f32.mrf.mxu0
      %v960 = vadd.f32 %v900, %v959
      %v961 = vpop.f32.mrf.mxu0
      %v962 = vadd.f32 %v900, %v961
      %963 = vmatmul.bf16.gmra.mxu0 %v867
      %v964 = vpop.f32.mrf.mxu0
      %v965 = vadd.f32 %v900, %v964
      %v966 = vpop.f32.mrf.mxu0
      %v967 = vadd.f32 %v900, %v966
      %968 = vmatmul.bf16.gmra.mxu0 %v868
      %v969 = vpop.f32.mrf.mxu0
      %v970 = vadd.f32 %v900, %v969
      %v971 = vpop.f32.mrf.mxu0
      %v972 = vadd.f32 %v900, %v971
      %973 = vmatmul.bf16.gmra.mxu0 %v869
      %v974 = vpop.f32.mrf.mxu0
      %v975 = vadd.f32 %v900, %v974
      %v976 = vpop.f32.mrf.mxu0
      %v977 = vadd.f32 %v900, %v976
      %978 = vmatmul.bf16.gmra.mxu0 %v870
      %v979 = vpop.f32.mrf.mxu0
      %v980 = vadd.f32 %v900, %v979
      %v981 = vpop.f32.mrf.mxu0
      %v982 = vadd.f32 %v900, %v981
      %983 = vmatmul.bf16.gmra.mxu0 %v871
      %v984 = vpop.f32.mrf.mxu0
      %v985 = vadd.f32 %v900, %v984
      %v986 = vpop.f32.mrf.mxu0
      %v987 = vadd.f32 %v900, %v986
      %988 = vmatmul.bf16.gmra.mxu0 %v872
      %v989 = vpop.f32.mrf.mxu0
      %v990 = vadd.f32 %v900, %v989
      %v991 = vpop.f32.mrf.mxu0
      %v992 = vadd.f32 %v900, %v991
      %993 = vmatmul.bf16.gmra.mxu0 %v873
      %v994 = vpop.f32.mrf.mxu0
      %v995 = vadd.f32 %v900, %v994
      %v996 = vpop.f32.mrf.mxu0
      %v997 = vadd.f32 %v900, %v996
      %998 = vmatmul.bf16.gmra.mxu0 %v874
      %v999 = vpop.f32.mrf.mxu0
      %v1000 = vadd.f32 %v900, %v999
      %v1001 = vpop.f32.mrf.mxu0
      %v1002 = vadd.f32 %v900, %v1001
      %1003 = vmatmul.bf16.gmra.mxu0 %v875
      %v1004 = vpop.f32.mrf.mxu0
      %v1005 = vadd.f32 %v900, %v1004
      %v1006 = vpop.f32.mrf.mxu0
      %v1007 = vadd.f32 %v900, %v1006
      %1008 = vmatmul.bf16.gmra.mxu0 %v876
      %v1009 = vpop.f32.mrf.mxu0
      %v1010 = vadd.f32 %v900, %v1009
      %v1011 = vpop.f32.mrf.mxu0
      %v1012 = vadd.f32 %v900, %v1011
      %1013 = vmatmul.bf16.gmra.mxu0 %v877
      %v1014 = vpop.f32.mrf.mxu0
      %v1015 = vadd.f32 %v900, %v1014
      %v1016 = vpop.f32.mrf.mxu0
      %v1017 = vadd.f32 %v900, %v1016
      %1018 = vmatmul.bf16.gmra.mxu0 %v878
      %v1019 = vpop.f32.mrf.mxu0
      %v1020 = vadd.f32 %v900, %v1019
      %v1021 = vpop.f32.mrf.mxu0
      %v1022 = vadd.f32 %v900, %v1021
      %1023 = vmatmul.bf16.gmra.mxu0 %v879
      %v1024 = vpop.f32.mrf.mxu0
      %v1025 = vadd.f32 %v900, %v1024
      %v1026 = vpop.f32.mrf.mxu0
      %v1027 = vadd.f32 %v900, %v1026
      %1028 = vmatmul.bf16.gmra.mxu0 %v880
      %v1029 = vpop.f32.mrf.mxu0
      %v1030 = vadd.f32 %v900, %v1029
      %v1031 = vpop.f32.mrf.mxu0
      %v1032 = vadd.f32 %v900, %v1031
      %1033 = vmatmul.bf16.gmra.mxu0 %v881
      %v1034 = vpop.f32.mrf.mxu0
      %v1035 = vadd.f32 %v900, %v1034
      %v1036 = vpop.f32.mrf.mxu0
      %v1037 = vadd.f32 %v900, %v1036
      %1038 = vdwg.mxu0
      %v1039 = vtanh.pop %v960
      %v1040 = vtanh.pop %v962
      %v1041 = vtanh.pop %v965
      %v1042 = vtanh.pop %v967
      %v1043 = vtanh.pop %v970
      %v1044 = vtanh.pop %v972
      %v1045 = vtanh.pop %v975
      %v1046 = vtanh.pop %v977
      %v1047 = vtanh.pop %v980
      %v1048 = vtanh.pop %v982
      %v1049 = vtanh.pop %v985
      %v1050 = vtanh.pop %v987
      %v1051 = vtanh.pop %v990
      %v1052 = vtanh.pop %v992
      %v1053 = vtanh.pop %v995
      %v1054 = vtanh.pop %v997
      %v1055 = vtanh.pop %v1000
      %v1056 = vtanh.pop %v1002
      %v1057 = vtanh.pop %v1005
      %v1058 = vtanh.pop %v1007
      %v1059 = vtanh.pop %v1010
      %v1060 = vtanh.pop %v1012
      %v1061 = vtanh.pop %v1015
      %v1062 = vtanh.pop %v1017
      %v1063 = vtanh.pop %v1020
      %v1064 = vtanh.pop %v1022
      %v1065 = vtanh.pop %v1025
      %v1066 = vtanh.pop %v1027
      %v1067 = vtanh.pop %v1030
      %v1068 = vtanh.pop %v1032
      %v1069 = vtanh.pop %v1035
      %v1070 = vtanh.pop %v1037
      %v1071 = vpack.c.bf16 %v1040, %v1039
      %v1072 = vpack.c.bf16 %v1042, %v1041
      %v1073 = vpack.c.bf16 %v1044, %v1043
      %v1074 = vpack.c.bf16 %v1046, %v1045
      %v1075 = vpack.c.bf16 %v1048, %v1047
      %v1076 = vpack.c.bf16 %v1050, %v1049
      %v1077 = vpack.c.bf16 %v1052, %v1051
      %v1078 = vpack.c.bf16 %v1054, %v1053
      %v1079 = vpack.c.bf16 %v1056, %v1055
      %v1080 = vpack.c.bf16 %v1058, %v1057
      %v1081 = vpack.c.bf16 %v1060, %v1059
      %v1082 = vpack.c.bf16 %v1062, %v1061
      %v1083 = vpack.c.bf16 %v1064, %v1063
      %v1084 = vpack.c.bf16 %v1066, %v1065
      %v1085 = vpack.c.bf16 %v1068, %v1067
      %v1086 = vpack.c.bf16 %v1070, %v1069
      %v1087 = vld [vmem:[%s7] sm:$0xf]
      %v1088 = vld [vmem:[%s7 + $0x4] sm:$0xf]
      %v1089 = vld [vmem:[%s7 + $0x8] sm:$0xf]
      %v1090 = vld [vmem:[%s7 + $0xc] sm:$0xf]
      %v1091 = vld [vmem:[%s7 + $0x10] sm:$0xf]
      %v1092 = vld [vmem:[%s7 + $0x14] sm:$0xf]
      %v1093 = vld [vmem:[%s7 + $0x18] sm:$0xf]
      %v1094 = vld [vmem:[%s7 + $0x1c] sm:$0xf]
      %v1095 = vld [vmem:[%s8] sm:$0x1]
      %v1097 = vperm.slane %v1095, 0
      %v1107 = vunpack.c.l.b16 %v1087
      %v1108 = vunpack.c.l.b16 %v1088
      %v1109 = vunpack.c.l.b16 %v1089
      %v1110 = vunpack.c.l.b16 %v1090
      %v1111 = vunpack.c.l.b16 %v1091
      %v1112 = vunpack.c.l.b16 %v1092
      %v1113 = vunpack.c.l.b16 %v1093
      %v1114 = vunpack.c.l.b16 %v1094
      %v1115 = vpack.c.b16 %v1108, %v1107
      %v1116 = vpack.c.b16 %v1110, %v1109
      %v1117 = vpack.c.b16 %v1112, %v1111
      %v1118 = vpack.c.b16 %v1114, %v1113
      %vm1123 = vcmask 523264
      %v1125 = vsel %vm1123, %v1071, 0
      %v1128 = vsel %vm1123, %v1072, 0
      %v1131 = vsel %vm1123, %v1073, 0
      %v1134 = vsel %vm1123, %v1074, 0
      %v1137 = vsel %vm1123, %v1075, 0
      %v1140 = vsel %vm1123, %v1076, 0
      %v1143 = vsel %vm1123, %v1077, 0
      %v1146 = vsel %vm1123, %v1078, 0
      %v1149 = vsel %vm1123, %v1079, 0
      %v1152 = vsel %vm1123, %v1080, 0
      %v1155 = vsel %vm1123, %v1081, 0
      %v1158 = vsel %vm1123, %v1082, 0
      %v1161 = vsel %vm1123, %v1083, 0
      %v1164 = vsel %vm1123, %v1084, 0
      %v1167 = vsel %vm1123, %v1085, 0
      %v1170 = vsel %vm1123, %v1086, 0
      %1172 = vmatpush.bf16.msra.mxu0 0
      %1173 = vmatpush.bf16.msra.mxu0 0
      %1174 = vmatpush.bf16.msra.mxu0 0
      %1175 = vmatpush.bf16.msra.mxu0 0
      %1176 = vmatpush.bf16.msra.mxu0 %v1118
      %1177 = vmatpush.bf16.msra.mxu0 %v1117
      %1178 = vmatpush.bf16.msra.mxu0 %v1116
      %1179 = vmatpush.bf16.msra.mxu0 %v1115
      %1180 = vmatmul.bf16.gmra.mxu0 %v1125
      %v1181 = vpop.f32.mrf.mxu0
      %v1182 = vadd.f32 %v1097, %v1181
      %v1183 = vpop.f32.mrf.mxu0
      %v1184 = vadd.f32 %v1097, %v1183
      %1185 = vmatmul.bf16.gmra.mxu0 %v1128
      %v1186 = vpop.f32.mrf.mxu0
      %v1187 = vadd.f32 %v1097, %v1186
      %v1188 = vpop.f32.mrf.mxu0
      %v1189 = vadd.f32 %v1097, %v1188
      %1190 = vmatmul.bf16.gmra.mxu0 %v1131
      %v1191 = vpop.f32.mrf.mxu0
      %v1192 = vadd.f32 %v1097, %v1191
      %v1193 = vpop.f32.mrf.mxu0
      %v1194 = vadd.f32 %v1097, %v1193
      %1195 = vmatmul.bf16.gmra.mxu0 %v1134
      %v1196 = vpop.f32.mrf.mxu0
      %v1197 = vadd.f32 %v1097, %v1196
      %v1198 = vpop.f32.mrf.mxu0
      %v1199 = vadd.f32 %v1097, %v1198
      %1200 = vmatmul.bf16.gmra.mxu0 %v1137
      %v1201 = vpop.f32.mrf.mxu0
      %v1202 = vadd.f32 %v1097, %v1201
      %v1203 = vpop.f32.mrf.mxu0
      %v1204 = vadd.f32 %v1097, %v1203
      %1205 = vmatmul.bf16.gmra.mxu0 %v1140
      %v1206 = vpop.f32.mrf.mxu0
      %v1207 = vadd.f32 %v1097, %v1206
      %v1208 = vpop.f32.mrf.mxu0
      %v1209 = vadd.f32 %v1097, %v1208
      %1210 = vmatmul.bf16.gmra.mxu0 %v1143
      %v1211 = vpop.f32.mrf.mxu0
      %v1212 = vadd.f32 %v1097, %v1211
      %v1213 = vpop.f32.mrf.mxu0
      %v1214 = vadd.f32 %v1097, %v1213
      %1215 = vmatmul.bf16.gmra.mxu0 %v1146
      %v1216 = vpop.f32.mrf.mxu0
      %v1217 = vadd.f32 %v1097, %v1216
      %v1218 = vpop.f32.mrf.mxu0
      %v1219 = vadd.f32 %v1097, %v1218
      %1220 = vmatmul.bf16.gmra.mxu0 %v1149
      %v1221 = vpop.f32.mrf.mxu0
      %v1222 = vadd.f32 %v1097, %v1221
      %v1223 = vpop.f32.mrf.mxu0
      %v1224 = vadd.f32 %v1097, %v1223
      %1225 = vmatmul.bf16.gmra.mxu0 %v1152
      %v1226 = vpop.f32.mrf.mxu0
      %v1227 = vadd.f32 %v1097, %v1226
      %v1228 = vpop.f32.mrf.mxu0
      %v1229 = vadd.f32 %v1097, %v1228
      %1230 = vmatmul.bf16.gmra.mxu0 %v1155
      %v1231 = vpop.f32.mrf.mxu0
      %v1232 = vadd.f32 %v1097, %v1231
      %v1233 = vpop.f32.mrf.mxu0
      %v1234 = vadd.f32 %v1097, %v1233
      %1235 = vmatmul.bf16.gmra.mxu0 %v1158
      %v1236 = vpop.f32.mrf.mxu0
      %v1237 = vadd.f32 %v1097, %v1236
      %v1238 = vpop.f32.mrf.mxu0
      %v1239 = vadd.f32 %v1097, %v1238
      %1240 = vmatmul.bf16.gmra.mxu0 %v1161
      %v1241 = vpop.f32.mrf.mxu0
      %v1242 = vadd.f32 %v1097, %v1241
      %v1243 = vpop.f32.mrf.mxu0
      %v1244 = vadd.f32 %v1097, %v1243
      %1245 = vmatmul.bf16.gmra.mxu0 %v1164
      %v1246 = vpop.f32.mrf.mxu0
      %v1247 = vadd.f32 %v1097, %v1246
      %v1248 = vpop.f32.mrf.mxu0
      %v1249 = vadd.f32 %v1097, %v1248
      %1250 = vmatmul.bf16.gmra.mxu0 %v1167
      %v1251 = vpop.f32.mrf.mxu0
      %v1252 = vadd.f32 %v1097, %v1251
      %v1253 = vpop.f32.mrf.mxu0
      %v1254 = vadd.f32 %v1097, %v1253
      %1255 = vmatmul.bf16.gmra.mxu0 %v1170
      %v1256 = vpop.f32.mrf.mxu0
      %v1257 = vadd.f32 %v1097, %v1256
      %v1258 = vpop.f32.mrf.mxu0
      %v1259 = vadd.f32 %v1097, %v1258
      %1260 = vdwg.mxu0
      %v1261 = vtanh.pop %v1182
      %v1262 = vtanh.pop %v1184
      %v1263 = vtanh.pop %v1187
      %v1264 = vtanh.pop %v1189
      %v1265 = vtanh.pop %v1192
      %v1266 = vtanh.pop %v1194
      %v1267 = vtanh.pop %v1197
      %v1268 = vtanh.pop %v1199
      %v1269 = vtanh.pop %v1202
      %v1270 = vtanh.pop %v1204
      %v1271 = vtanh.pop %v1207
      %v1272 = vtanh.pop %v1209
      %v1273 = vtanh.pop %v1212
      %v1274 = vtanh.pop %v1214
      %v1275 = vtanh.pop %v1217
      %v1276 = vtanh.pop %v1219
      %v1277 = vtanh.pop %v1222
      %v1278 = vtanh.pop %v1224
      %v1279 = vtanh.pop %v1227
      %v1280 = vtanh.pop %v1229
      %v1281 = vtanh.pop %v1232
      %v1282 = vtanh.pop %v1234
      %v1283 = vtanh.pop %v1237
      %v1284 = vtanh.pop %v1239
      %v1285 = vtanh.pop %v1242
      %v1286 = vtanh.pop %v1244
      %v1287 = vtanh.pop %v1247
      %v1288 = vtanh.pop %v1249
      %v1289 = vtanh.pop %v1252
      %v1290 = vtanh.pop %v1254
      %v1291 = vtanh.pop %v1257
      %v1292 = vtanh.pop %v1259
      %v1293 = vpack.c.bf16 %v1262, %v1261
      %v1294 = vpack.c.bf16 %v1264, %v1263
      %v1295 = vpack.c.bf16 %v1266, %v1265
      %v1296 = vpack.c.bf16 %v1268, %v1267
      %v1297 = vpack.c.bf16 %v1270, %v1269
      %v1298 = vpack.c.bf16 %v1272, %v1271
      %v1299 = vpack.c.bf16 %v1274, %v1273
      %v1300 = vpack.c.bf16 %v1276, %v1275
      %v1301 = vpack.c.bf16 %v1278, %v1277
      %v1302 = vpack.c.bf16 %v1280, %v1279
      %v1303 = vpack.c.bf16 %v1282, %v1281
      %v1304 = vpack.c.bf16 %v1284, %v1283
      %v1305 = vpack.c.bf16 %v1286, %v1285
      %v1306 = vpack.c.bf16 %v1288, %v1287
      %v1307 = vpack.c.bf16 %v1290, %v1289
      %v1308 = vpack.c.bf16 %v1292, %v1291
      %v1309 = vld [vmem:[%s9] sm:$0xf]
      %v1310 = vld [vmem:[%s9 + $0x4] sm:$0xf]
      %v1311 = vld [vmem:[%s9 + $0x8] sm:$0xf]
      %v1312 = vld [vmem:[%s9 + $0xc] sm:$0xf]
      %v1313 = vld [vmem:[%s10] sm:$0x1]
      %v1315 = vperm.slane %v1313, 0
      %v1321 = vunpack.c.l.b16 %v1309
      %v1322 = vunpack.c.l.b16 %v1310
      %v1323 = vunpack.c.l.b16 %v1311
      %v1324 = vunpack.c.l.b16 %v1312
      %v1325 = vpack.c.b16 %v1322, %v1321
      %v1326 = vpack.c.b16 %v1324, %v1323
      %vm1329 = vcmask 261120
      %v1331 = vsel %vm1329, %v1293, 0
      %v1334 = vsel %vm1329, %v1294, 0
      %v1337 = vsel %vm1329, %v1295, 0
      %v1340 = vsel %vm1329, %v1296, 0
      %v1343 = vsel %vm1329, %v1297, 0
      %v1346 = vsel %vm1329, %v1298, 0
      %v1349 = vsel %vm1329, %v1299, 0
      %v1352 = vsel %vm1329, %v1300, 0
      %v1355 = vsel %vm1329, %v1301, 0
      %v1358 = vsel %vm1329, %v1302, 0
      %v1361 = vsel %vm1329, %v1303, 0
      %v1364 = vsel %vm1329, %v1304, 0
      %v1367 = vsel %vm1329, %v1305, 0
      %v1370 = vsel %vm1329, %v1306, 0
      %v1373 = vsel %vm1329, %v1307, 0
      %v1376 = vsel %vm1329, %v1308, 0
      %1378 = vmatpush.bf16.msra.mxu0 0
      %1379 = vmatpush.bf16.msra.mxu0 0
      %1380 = vmatpush.bf16.msra.mxu0 0
      %1381 = vmatpush.bf16.msra.mxu0 0
      %1382 = vmatpush.bf16.msra.mxu0 0
      %1383 = vmatpush.bf16.msra.mxu0 0
      %1384 = vmatpush.bf16.msra.mxu0 %v1326
      %1385 = vmatpush.bf16.msra.mxu0 %v1325
      %1386 = vmatmul.bf16.gmra.mxu0 %v1331
      %v1387 = vpop.f32.mrf.mxu0
      %v1388 = vadd.f32 %v1315, %v1387
      %v1389 = vpop.f32.mrf.mxu0
      %v1390 = vadd.f32 %v1315, %v1389
      %1391 = vmatmul.bf16.gmra.mxu0 %v1334
      %v1392 = vpop.f32.mrf.mxu0
      %v1393 = vadd.f32 %v1315, %v1392
      %v1394 = vpop.f32.mrf.mxu0
      %v1395 = vadd.f32 %v1315, %v1394
      %1396 = vmatmul.bf16.gmra.mxu0 %v1337
      %v1397 = vpop.f32.mrf.mxu0
      %v1398 = vadd.f32 %v1315, %v1397
      %v1399 = vpop.f32.mrf.mxu0
      %v1400 = vadd.f32 %v1315, %v1399
      %1401 = vmatmul.bf16.gmra.mxu0 %v1340
      %v1402 = vpop.f32.mrf.mxu0
      %v1403 = vadd.f32 %v1315, %v1402
      %v1404 = vpop.f32.mrf.mxu0
      %v1405 = vadd.f32 %v1315, %v1404
      %1406 = vmatmul.bf16.gmra.mxu0 %v1343
      %v1407 = vpop.f32.mrf.mxu0
      %v1408 = vadd.f32 %v1315, %v1407
      %v1409 = vpop.f32.mrf.mxu0
      %v1410 = vadd.f32 %v1315, %v1409
      %1411 = vmatmul.bf16.gmra.mxu0 %v1346
      %v1412 = vpop.f32.mrf.mxu0
      %v1413 = vadd.f32 %v1315, %v1412
      %v1414 = vpop.f32.mrf.mxu0
      %v1415 = vadd.f32 %v1315, %v1414
      %1416 = vmatmul.bf16.gmra.mxu0 %v1349
      %v1417 = vpop.f32.mrf.mxu0
      %v1418 = vadd.f32 %v1315, %v1417
      %v1419 = vpop.f32.mrf.mxu0
      %v1420 = vadd.f32 %v1315, %v1419
      %1421 = vmatmul.bf16.gmra.mxu0 %v1352
      %v1422 = vpop.f32.mrf.mxu0
      %v1423 = vadd.f32 %v1315, %v1422
      %v1424 = vpop.f32.mrf.mxu0
      %v1425 = vadd.f32 %v1315, %v1424
      %1426 = vmatmul.bf16.gmra.mxu0 %v1355
      %v1427 = vpop.f32.mrf.mxu0
      %v1428 = vadd.f32 %v1315, %v1427
      %v1429 = vpop.f32.mrf.mxu0
      %v1430 = vadd.f32 %v1315, %v1429
      %1431 = vmatmul.bf16.gmra.mxu0 %v1358
      %v1432 = vpop.f32.mrf.mxu0
      %v1433 = vadd.f32 %v1315, %v1432
      %v1434 = vpop.f32.mrf.mxu0
      %v1435 = vadd.f32 %v1315, %v1434
      %1436 = vmatmul.bf16.gmra.mxu0 %v1361
      %v1437 = vpop.f32.mrf.mxu0
      %v1438 = vadd.f32 %v1315, %v1437
      %v1439 = vpop.f32.mrf.mxu0
      %v1440 = vadd.f32 %v1315, %v1439
      %1441 = vmatmul.bf16.gmra.mxu0 %v1364
      %v1442 = vpop.f32.mrf.mxu0
      %v1443 = vadd.f32 %v1315, %v1442
      %v1444 = vpop.f32.mrf.mxu0
      %v1445 = vadd.f32 %v1315, %v1444
      %1446 = vmatmul.bf16.gmra.mxu0 %v1367
      %v1447 = vpop.f32.mrf.mxu0
      %v1448 = vadd.f32 %v1315, %v1447
      %v1449 = vpop.f32.mrf.mxu0
      %v1450 = vadd.f32 %v1315, %v1449
      %1451 = vmatmul.bf16.gmra.mxu0 %v1370
      %v1452 = vpop.f32.mrf.mxu0
      %v1453 = vadd.f32 %v1315, %v1452
      %v1454 = vpop.f32.mrf.mxu0
      %v1455 = vadd.f32 %v1315, %v1454
      %1456 = vmatmul.bf16.gmra.mxu0 %v1373
      %v1457 = vpop.f32.mrf.mxu0
      %v1458 = vadd.f32 %v1315, %v1457
      %v1459 = vpop.f32.mrf.mxu0
      %v1460 = vadd.f32 %v1315, %v1459
      %1461 = vmatmul.bf16.gmra.mxu0 %v1376
      %v1462 = vpop.f32.mrf.mxu0
      %v1463 = vadd.f32 %v1315, %v1462
      %v1464 = vpop.f32.mrf.mxu0
      %v1465 = vadd.f32 %v1315, %v1464
      %1466 = vdwg.mxu0
      %vm1467 = vcmask 97280
      %1468 = vst.msk [vmem:[%s410] sm:$0xff] %vm1467, %v1388
      %1469 = vst.msk [vmem:[%s410 + $0x8] sm:$0xff] %vm1467, %v1390
      %1470 = vst.msk [vmem:[%s410 + $0x10] sm:$0xff] %vm1467, %v1393
      %1471 = vst.msk [vmem:[%s410 + $0x18] sm:$0xff] %vm1467, %v1395
      %1472 = vst.msk [vmem:[%s410 + $0x20] sm:$0xff] %vm1467, %v1398
      %1473 = vst.msk [vmem:[%s410 + $0x28] sm:$0xff] %vm1467, %v1400
      %1474 = vst.msk [vmem:[%s410 + $0x30] sm:$0xff] %vm1467, %v1403
      %1475 = vst.msk [vmem:[%s410 + $0x38] sm:$0xff] %vm1467, %v1405
      %1476 = vst.msk [vmem:[%s410 + $0x40] sm:$0xff] %vm1467, %v1408
      %1477 = vst.msk [vmem:[%s410 + $0x48] sm:$0xff] %vm1467, %v1410
      %1478 = vst.msk [vmem:[%s410 + $0x50] sm:$0xff] %vm1467, %v1413
      %1479 = vst.msk [vmem:[%s410 + $0x58] sm:$0xff] %vm1467, %v1415
      %1480 = vst.msk [vmem:[%s410 + $0x60] sm:$0xff] %vm1467, %v1418
      %1481 = vst.msk [vmem:[%s410 + $0x68] sm:$0xff] %vm1467, %v1420
      %1482 = vst.msk [vmem:[%s410 + $0x70] sm:$0xff] %vm1467, %v1423
      %1483 = vst.msk [vmem:[%s410 + $0x78] sm:$0xff] %vm1467, %v1425
      %1484 = vst.msk [vmem:[%s410 + $0x80] sm:$0xff] %vm1467, %v1428
      %1485 = vst.msk [vmem:[%s410 + $0x88] sm:$0xff] %vm1467, %v1430
      %1486 = vst.msk [vmem:[%s410 + $0x90] sm:$0xff] %vm1467, %v1433
      %1487 = vst.msk [vmem:[%s410 + $0x98] sm:$0xff] %vm1467, %v1435
      %1488 = vst.msk [vmem:[%s410 + $0xa0] sm:$0xff] %vm1467, %v1438
      %1489 = vst.msk [vmem:[%s410 + $0xa8] sm:$0xff] %vm1467, %v1440
      %1490 = vst.msk [vmem:[%s410 + $0xb0] sm:$0xff] %vm1467, %v1443
      %1491 = vst.msk [vmem:[%s410 + $0xb8] sm:$0xff] %vm1467, %v1445
      %1492 = vst.msk [vmem:[%s410 + $0xc0] sm:$0xff] %vm1467, %v1448
      %1493 = vst.msk [vmem:[%s410 + $0xc8] sm:$0xff] %vm1467, %v1450
      %1494 = vst.msk [vmem:[%s410 + $0xd0] sm:$0xff] %vm1467, %v1453
      %1495 = vst.msk [vmem:[%s410 + $0xd8] sm:$0xff] %vm1467, %v1455
      %1496 = vst.msk [vmem:[%s410 + $0xe0] sm:$0xff] %vm1467, %v1458
      %1497 = vst.msk [vmem:[%s410 + $0xe8] sm:$0xff] %vm1467, %v1460
      %1498 = vst.msk [vmem:[%s410 + $0xf0] sm:$0xff] %vm1467, %v1463
      %1499 = vst.msk [vmem:[%s410 + $0xf8] sm:$0xff] %vm1467, %v1465
      %s1500 = smul.u32 32, %s22
      %p1501 = scmp.lt.s32.totalorder %s1500, 63
      %s1502 = scalar_select %p1501, %s1500, 63
      %s1503 = smul.addr %s1502, 8
      %s1504 = scalar_lea.vmem %s11, %s1503
      // Predicated region
      $region65: #{decoder_forward.1} parent=63 // pred_check
        %p1505 = pneg %p281
      $region66: #{decoder_forward.1} parent=63 // pred_check_branch
        %1507 = sbr.rel (%p1505) target = $region68
      $region67: #{decoder_forward.1} parent=63 // pred_region
        %s1508 = smul.u32 32, %s22
      $region68: #{decoder_forward.1} parent=63 // pred_fallthru
        _
    $region64: #{decoder_forward.1} parent=5 // pred_fallthru
      _
    %p1509 = scmp.le.s32.totalorder 2, %s17
    // Predicated region
    $region69: #{decoder_forward.1} parent=5 // pred_check
      %p1510 = pneg %p1509
    $region70: #{decoder_forward.1} parent=5 // pred_check_branch
      %1512 = sbr.rel (%p1510) target = $region72
    $region71: #{decoder_forward.1} parent=5 // pred_region
      %s1513 = ssub.s32 %s17, 2
      // Predicated region
      $region73: #{decoder_forward.1} parent=71 // pred_check
        %p1514 = pneg %p287
      $region74: #{decoder_forward.1} parent=71 // pred_check_branch
        %1516 = sbr.rel (%p1514) target = $region76
      $region75: #{decoder_forward.1} parent=71 // pred_region
        %s1517 = smul.u32 32, %s23
        %p1518 = scmp.lt.s32.totalorder %s1517, 63
        %s1519 = scalar_select %p1518, %s1517, 63
        %s1520 = smul.addr %s1519, 8
        %s1521 = scalar_lea.vmem %s11, %s1520
      $region76: #{decoder_forward.1} parent=71 // pred_fallthru
        _
    $region72: #{decoder_forward.1} parent=5 // pred_fallthru
      _
  $region6: #{decoder_forward.1} parent=0 // loop_footer
    %s21 = sadd.s32 1, %s17
  $region7: #{decoder_forward.1} parent=0 // loop_footer_branch
    %16 = sbr.rel target = $region3
  $region8: #{decoder_forward.1} parent=0 // loop_exit
    _

</llo_original>
